<compile_context>
chip_gen: v6e
topology: v6e:2x2x1
jax: 0.10.0
libtpu: 0.0.40
codegen_flags: <defaults>
</compile_context>

<pallas_src>
import functools

import jax
import jax.numpy as jnp
from jax.experimental import pallas as pl
from jax.experimental.pallas import tpu as pltpu


def _conv_stats_kernel(x_ref, w_ref, y_ref, stats_ref, *, kh, kw, stride, ow, tr):
    """Implicit-GEMM conv tile + per-tile BatchNorm partial statistics.

    x_ref:     (1, in_rows, WP, Cin) bf16  padded NHWC input rows for this tile
    w_ref:     (Cout, KH*KW*Cin)     bf16  weights, K ordered (kh, kw, cin)
    y_ref:     (1, Cout, TM)         f32   conv output tile (lane dense)
    stats_ref: (1, 1, Cout, 2)       f32   per-tile (sum, sum_sq) per channel
    """
    tm = tr * ow
    cols = []
    for i in range(kh):
        for j in range(kw):
            if stride == 1:
                s = x_ref[0, i:i + tr, j:j + ow, :]
            else:
                s = x_ref[0, pl.ds(i, tr, stride), pl.ds(j, ow, stride), :]
            cols.append(s)                                     # (tr, ow, Cin)
    patches = jnp.concatenate(cols, axis=2)                    # (tr, ow, K)
    patches = patches.reshape(tm, patches.shape[2])            # (TM, K)

    # (Cout, K) x (TM, K)^T on the MXU with f32 accumulation -> (Cout, TM).
    y = jax.lax.dot_general(
        w_ref[...], patches,
        dimension_numbers=(((1,), (1,)), ((), ())),
        preferred_element_type=jnp.float32)
    y_ref[0] = y

    ssum = jnp.sum(y, axis=1, keepdims=True)                   # (Cout, 1)
    ssq = jnp.sum(y * y, axis=1, keepdims=True)                # (Cout, 1)
    stats_ref[0, 0] = jnp.concatenate([ssum, ssq], axis=1)     # (Cout, 2)


def _bn_relu_kernel(y_ref, scale_ref, shift_ref, o_ref, *, relu):
    # y_ref/o_ref: (1, Cout, TM); scale/shift: (Cout, 1)
    y = y_ref[0] * scale_ref[...] + shift_ref[...]
    if relu:
        y = jnp.maximum(y, 0.0)
    o_ref[0] = y


def _choose_tile_rows(oh, ow, max_lanes=2048):
    """Largest divisor tr of OH with tr*OW a multiple of 128 and <= max_lanes."""
    cands = [tr for tr in range(1, oh + 1)
             if oh % tr == 0 and (tr * ow) % 128 == 0 and tr * ow <= max_lanes]
    return max(cands) if cands else oh


def conv_bn_relu(x_nchw, weight, gamma, beta, *, stride=1, padding=0, eps=1e-5,
                 need_relu=True):
    """x: (N, Cin, H, W), weight: (Cout, Cin, KH, KW), gamma/beta: (Cout,) -> NCHW."""
    # TODO(synk): dilation > 1 and groups > 1 are not implemented (module defaults are 1).
    n, cin, h, w = x_nchw.shape
    cout, _, kh, kw = weight.shape
    oh = (h + 2 * padding - kh) // stride + 1
    ow = (w + 2 * padding - kw) // stride + 1
    ohw = oh * ow

    tr = _choose_tile_rows(oh, ow)          # output rows per tile
    tiles = oh // tr                        # tiles per batch sample
    tm = tr * ow                            # lane width of each output tile
    in_rows = stride * (tr - 1) + kh        # padded input rows feeding one tile

    # Zero-pad, go channels-last, cast matmul inputs to bf16.
    xp = jnp.pad(x_nchw, ((0, 0), (0, 0), (padding, padding), (padding, padding)))
    xp = xp.transpose(0, 2, 3, 1)                               # (N, HP, WP, Cin)
    wp_ = xp.shape[2]
    # Per-tile row windows (only the kh-1 overlap rows get duplicated).
    x_tiles = jnp.stack(
        [xp[:, t * stride * tr: t * stride * tr + in_rows] for t in range(tiles)],
        axis=1).reshape(n * tiles, in_rows, wp_, cin).astype(jnp.bfloat16)
    # (Cout, K) with K ordered (kh, kw, cin) to match the in-kernel patch build.
    w2 = weight.transpose(0, 2, 3, 1).reshape(cout, kh * kw * cin).astype(jnp.bfloat16)
    kflat = kh * kw * cin

    conv_kernel = functools.partial(_conv_stats_kernel, kh=kh, kw=kw,
                                    stride=stride, ow=ow, tr=tr)
    y, stats = pl.pallas_call(
        conv_kernel,
        out_shape=(jax.ShapeDtypeStruct((n, cout, ohw), jnp.float32),
                   jax.ShapeDtypeStruct((n, tiles, cout, 2), jnp.float32)),
        grid=(n, tiles),
        in_specs=[
            pl.BlockSpec((1, in_rows, wp_, cin),
                         lambda b, t: (b * tiles + t, 0, 0, 0)),
            pl.BlockSpec((cout, kflat), lambda b, t: (0, 0)),
        ],
        out_specs=(
            pl.BlockSpec((1, cout, tm), lambda b, t: (b, 0, t)),
            pl.BlockSpec((1, 1, cout, 2), lambda b, t: (b, t, 0, 0)),
        ),
        compiler_params=pltpu.CompilerParams(
            dimension_semantics=("parallel", "parallel")),
    )(x_tiles, w2)

    # Global batch statistics (tiny reduction -> scale/shift, plain JAX).
    m_total = jnp.float32(n * ohw)
    s = jnp.sum(stats, axis=(0, 1))                              # (Cout, 2)
    mean = s[:, 0] / m_total
    var = jnp.maximum(s[:, 1] / m_total - mean * mean, 0.0)      # biased variance
    inv = jax.lax.rsqrt(var + eps)
    g32 = gamma.astype(jnp.float32)
    scale = (g32 * inv).reshape(cout, 1)
    shift = (beta.astype(jnp.float32) - mean * g32 * inv).reshape(cout, 1)

    out = pl.pallas_call(
        functools.partial(_bn_relu_kernel, relu=need_relu),
        out_shape=jax.ShapeDtypeStruct((n, cout, ohw), jnp.float32),
        grid=(n, tiles),
        in_specs=[
            pl.BlockSpec((1, cout, tm), lambda b, t: (b, 0, t)),
            pl.BlockSpec((cout, 1), lambda b, t: (0, 0)),
            pl.BlockSpec((cout, 1), lambda b, t: (0, 0)),
        ],
        out_specs=pl.BlockSpec((1, cout, tm), lambda b, t: (b, 0, t)),
        compiler_params=pltpu.CompilerParams(
            dimension_semantics=("parallel", "parallel")),
    )(y, scale, shift)

    # (N, Cout, OH*OW) -> (N, Cout, OH, OW): contiguous reshape, no transpose.
    return out.reshape(n, cout, oh, ow)


def _reference(x, weight, gamma, beta, *, stride, padding, eps, need_relu=True):
    y = jax.lax.conv_general_dilated(
        x, weight, window_strides=(stride, stride),
        padding=[(padding, padding), (padding, padding)],
        dimension_numbers=("NCHW", "OIHW", "NCHW"))
    mean = jnp.mean(y, axis=(0, 2, 3), keepdims=True)
    var = jnp.var(y, axis=(0, 2, 3), keepdims=True)              # biased
    y = (y - mean) * jax.lax.rsqrt(var + eps)
    y = y * gamma.reshape(1, -1, 1, 1) + beta.reshape(1, -1, 1, 1)
    return jnp.maximum(y, 0.0) if need_relu else y


if __name__ == "__main__":
    # Conv_BN_ReLU(in_channels=4, out_channels=8, kernel_size=3, stride=1,
    #              padding=1, bias=False, need_relu=True)
    N, CIN, H, W = 2, 4, 16, 16
    COUT, KH, KW = 8, 3, 3
    STRIDE, PAD, EPS = 1, 1, 1e-5

    key = jax.random.PRNGKey(0)
    kx, kw_key = jax.random.split(key)

    x = jax.random.normal(kx, (N, CIN, H, W), dtype=jnp.float32)
    # kaiming_normal_ (fan_in mode, gain=sqrt(2)) on the conv weight.
    fan_in = CIN * KH * KW
    weight = jax.random.normal(kw_key, (COUT, CIN, KH, KW), dtype=jnp.float32)
    weight = weight * jnp.sqrt(2.0 / fan_in)
    gamma = jnp.ones((COUT,), dtype=jnp.float32)     # BatchNorm2d affine init
    beta = jnp.zeros((COUT,), dtype=jnp.float32)

    out = conv_bn_relu(x, weight, gamma, beta, stride=STRIDE, padding=PAD, eps=EPS)
    jax.block_until_ready(out)
    assert out.shape == (N, COUT, H, W)

    ref = _reference(x, weight, gamma, beta, stride=STRIDE, padding=PAD, eps=EPS)
    # bf16 matmul operands -> loose tolerance vs the f32 reference.
    assert jnp.allclose(out, ref, atol=1e-1, rtol=1e-2), (
        float(jnp.max(jnp.abs(out - ref))))

    print("KERNEL_OK")
</pallas_src>

<mosaic_0001>
module attributes {stable_mosaic.version = 11 : i64} {
  func.func @_conv_stats_kernel(%arg0: i32, %arg1: i32, %arg2: memref<1x18x18x4xbf16, #tpu.memory_space<vmem>>, %arg3: memref<8x36xbf16, #tpu.memory_space<vmem>>, %arg4: memref<1x8x256xf32, #tpu.memory_space<vmem>>, %arg5: memref<1x1x8x2xf32, #tpu.memory_space<vmem>>) attributes {dimension_semantics = [#tpu.dimension_semantics<parallel>, #tpu.dimension_semantics<parallel>], iteration_bounds = array<i64: 2, 1>, scalar_prefetch = 0 : i64, scratch_operands = 0 : i64, tpu.core_type = #tpu.core_type<tc>, window_params = [{transform_indices = @transform_0, window_bounds = array<i64: 1, 18, 18, 4>}, {pipeline_mode = #tpu.pipeline_mode<synchronous>, transform_indices = @transform_1, window_bounds = array<i64: 8, 36>}, {transform_indices = @transform_2, window_bounds = array<i64: 1, 8, 256>}, {transform_indices = @transform_3, window_bounds = array<i64: 1, 1, 8, 2>}]} {
    %c0 = arith.constant 0 : index
    %c0_0 = arith.constant 0 : index
    %c0_1 = arith.constant 0 : index
    %c0_2 = arith.constant 0 : index
    %0 = vector.load %arg2[%c0, %c0_0, %c0_1, %c0_2] : memref<1x18x18x4xbf16, #tpu.memory_space<vmem>>, vector<1x16x16x4xbf16>
    %1 = vector.shape_cast %0 : vector<1x16x16x4xbf16> to vector<16x16x4xbf16>
    %c0_3 = arith.constant 0 : index
    %c0_4 = arith.constant 0 : index
    %c1 = arith.constant 1 : index
    %c0_5 = arith.constant 0 : index
    %2 = vector.load %arg2[%c0_3, %c0_4, %c1, %c0_5] : memref<1x18x18x4xbf16, #tpu.memory_space<vmem>>, vector<1x16x16x4xbf16>
    %3 = vector.shape_cast %2 : vector<1x16x16x4xbf16> to vector<16x16x4xbf16>
    %c0_6 = arith.constant 0 : index
    %c0_7 = arith.constant 0 : index
    %c2 = arith.constant 2 : index
    %c0_8 = arith.constant 0 : index
    %4 = vector.load %arg2[%c0_6, %c0_7, %c2, %c0_8] : memref<1x18x18x4xbf16, #tpu.memory_space<vmem>>, vector<1x16x16x4xbf16>
    %5 = vector.shape_cast %4 : vector<1x16x16x4xbf16> to vector<16x16x4xbf16>
    %c0_9 = arith.constant 0 : index
    %c1_10 = arith.constant 1 : index
    %c0_11 = arith.constant 0 : index
    %c0_12 = arith.constant 0 : index
    %6 = vector.load %arg2[%c0_9, %c1_10, %c0_11, %c0_12] : memref<1x18x18x4xbf16, #tpu.memory_space<vmem>>, vector<1x16x16x4xbf16>
    %7 = vector.shape_cast %6 : vector<1x16x16x4xbf16> to vector<16x16x4xbf16>
    %c0_13 = arith.constant 0 : index
    %c1_14 = arith.constant 1 : index
    %c1_15 = arith.constant 1 : index
    %c0_16 = arith.constant 0 : index
    %8 = vector.load %arg2[%c0_13, %c1_14, %c1_15, %c0_16] : memref<1x18x18x4xbf16, #tpu.memory_space<vmem>>, vector<1x16x16x4xbf16>
    %9 = vector.shape_cast %8 : vector<1x16x16x4xbf16> to vector<16x16x4xbf16>
    %c0_17 = arith.constant 0 : index
    %c1_18 = arith.constant 1 : index
    %c2_19 = arith.constant 2 : index
    %c0_20 = arith.constant 0 : index
    %10 = vector.load %arg2[%c0_17, %c1_18, %c2_19, %c0_20] : memref<1x18x18x4xbf16, #tpu.memory_space<vmem>>, vector<1x16x16x4xbf16>
    %11 = vector.shape_cast %10 : vector<1x16x16x4xbf16> to vector<16x16x4xbf16>
    %c0_21 = arith.constant 0 : index
    %c2_22 = arith.constant 2 : index
    %c0_23 = arith.constant 0 : index
    %c0_24 = arith.constant 0 : index
    %12 = vector.load %arg2[%c0_21, %c2_22, %c0_23, %c0_24] : memref<1x18x18x4xbf16, #tpu.memory_space<vmem>>, vector<1x16x16x4xbf16>
    %13 = vector.shape_cast %12 : vector<1x16x16x4xbf16> to vector<16x16x4xbf16>
    %c0_25 = arith.constant 0 : index
    %c2_26 = arith.constant 2 : index
    %c1_27 = arith.constant 1 : index
    %c0_28 = arith.constant 0 : index
    %14 = vector.load %arg2[%c0_25, %c2_26, %c1_27, %c0_28] : memref<1x18x18x4xbf16, #tpu.memory_space<vmem>>, vector<1x16x16x4xbf16>
    %15 = vector.shape_cast %14 : vector<1x16x16x4xbf16> to vector<16x16x4xbf16>
    %c0_29 = arith.constant 0 : index
    %c2_30 = arith.constant 2 : index
    %c2_31 = arith.constant 2 : index
    %c0_32 = arith.constant 0 : index
    %16 = vector.load %arg2[%c0_29, %c2_30, %c2_31, %c0_32] : memref<1x18x18x4xbf16, #tpu.memory_space<vmem>>, vector<1x16x16x4xbf16>
    %17 = vector.shape_cast %16 : vector<1x16x16x4xbf16> to vector<16x16x4xbf16>
    %18 = tpu.concatenate %1, %3, %5, %7, %9, %11, %13, %15, %17 in 2 : vector<16x16x4xbf16>, vector<16x16x4xbf16>, vector<16x16x4xbf16>, vector<16x16x4xbf16>, vector<16x16x4xbf16>, vector<16x16x4xbf16>, vector<16x16x4xbf16>, vector<16x16x4xbf16>, vector<16x16x4xbf16> -> vector<16x16x36xbf16>
    %19 = vector.shape_cast %18 : vector<16x16x36xbf16> to vector<256x36xbf16>
    %c0_33 = arith.constant 0 : index
    %c0_34 = arith.constant 0 : index
    %20 = vector.load %arg3[%c0_33, %c0_34] : memref<8x36xbf16, #tpu.memory_space<vmem>>, vector<8x36xbf16>
    %cst = arith.constant dense<0.000000e+00> : vector<8x256xf32>
    %21 = tpu.matmul %20, %19, %cst {dimension_numbers = #tpu.dot_dimension_numbers<[1], [1], [0], [0], [0, 0, 1, 0], [], []>} : vector<8x36xbf16>, vector<256x36xbf16>, vector<8x256xf32> -> vector<8x256xf32>
    %c0_35 = arith.constant 0 : index
    %c0_36 = arith.constant 0 : index
    %c0_37 = arith.constant 0 : index
    %22 = vector.load %arg4[%c0_35, %c0_36, %c0_37] : memref<1x8x256xf32, #tpu.memory_space<vmem>>, vector<1x8x256xf32>
    %23 = vector.shape_cast %22 : vector<1x8x256xf32> to vector<8x256xf32>
    %24 = vector.shape_cast %21 : vector<8x256xf32> to vector<1x8x256xf32>
    tpu.vector_store %arg4[%c0_35, %c0_36, %c0_37], %24 {strides = array<i32>} : memref<1x8x256xf32, #tpu.memory_space<vmem>>, vector<1x8x256xf32>,
    %cst_38 = arith.constant dense<0.000000e+00> : vector<8xf32>
    %25 = vector.multi_reduction <add>, %21, %cst_38 [1] : vector<8x256xf32> to vector<8xf32>
    %26 = vector.shape_cast %25 : vector<8xf32> to vector<8x1xf32>
    %27 = arith.mulf %21, %21 : vector<8x256xf32>
    %cst_39 = arith.constant dense<0.000000e+00> : vector<8xf32>
    %28 = vector.multi_reduction <add>, %27, %cst_39 [1] : vector<8x256xf32> to vector<8xf32>
    %29 = vector.shape_cast %28 : vector<8xf32> to vector<8x1xf32>
    %30 = tpu.concatenate %26, %29 in 1 : vector<8x1xf32>, vector<8x1xf32> -> vector<8x2xf32>
    %c0_40 = arith.constant 0 : index
    %c0_41 = arith.constant 0 : index
    %c0_42 = arith.constant 0 : index
    %c0_43 = arith.constant 0 : index
    %31 = vector.load %arg5[%c0_40, %c0_41, %c0_42, %c0_43] : memref<1x1x8x2xf32, #tpu.memory_space<vmem>>, vector<1x1x8x2xf32>
    %32 = vector.shape_cast %31 : vector<1x1x8x2xf32> to vector<8x2xf32>
    %33 = vector.shape_cast %30 : vector<8x2xf32> to vector<1x1x8x2xf32>
    tpu.vector_store %arg5[%c0_40, %c0_41, %c0_42, %c0_43], %33 {strides = array<i32>} : memref<1x1x8x2xf32, #tpu.memory_space<vmem>>, vector<1x1x8x2xf32>,
    return
  }
  func.func @transform_0(%arg0: i32, %arg1: i32) -> (i32, i32, i32, i32) {
    %c1_i32 = arith.constant 1 : i32
    %0 = arith.muli %arg0, %c1_i32 : i32
    %1 = arith.addi %0, %arg1 : i32
    %c0_i32 = arith.constant 0 : i32
    %c0_i32_0 = arith.constant 0 : i32
    %c0_i32_1 = arith.constant 0 : i32
    %c0_i32_2 = arith.constant 0 : i32
    return %1, %c0_i32, %c0_i32_0, %c0_i32_1 : i32, i32, i32, i32
  }
  func.func @transform_1(%arg0: i32, %arg1: i32) -> (i32, i32) {
    %c0_i32 = arith.constant 0 : i32
    %c0_i32_0 = arith.constant 0 : i32
    %c0_i32_1 = arith.constant 0 : i32
    return %c0_i32, %c0_i32_0 : i32, i32
  }
  func.func @transform_2(%arg0: i32, %arg1: i32) -> (i32, i32, i32) {
    %c0_i32 = arith.constant 0 : i32
    %c0_i32_0 = arith.constant 0 : i32
    return %arg0, %c0_i32, %arg1 : i32, i32, i32
  }
  func.func @transform_3(%arg0: i32, %arg1: i32) -> (i32, i32, i32, i32) {
    %c0_i32 = arith.constant 0 : i32
    %c0_i32_0 = arith.constant 0 : i32
    %c0_i32_1 = arith.constant 0 : i32
    return %arg0, %arg1, %c0_i32, %c0_i32_0 : i32, i32, i32, i32
  }
}

</mosaic_0001>

<llo_original>
// kernel: tpu_custom_call.1
$region0: #{tpu_custom_call.1}
  #allocation0 [shape = 'u32[]', space=smem, size = 0x4, offset = 0x4, fixed_abs, tag = 'smem constant byte address 0x4 - core index']
  #allocation1 [shape = 'u32[144,128]{1,0:T(1,128)}', space=vmem, size = 0x12000, scoped, tag = 'internal scratch']
  %s0 = inlined_call_operand.vmem [shape: bf16[2,18,18,4], index: 0, kind: input, shape index: {}]
  %s1 = inlined_call_operand.vmem [shape: bf16[8,36], index: 1, kind: input, shape index: {}]
  %s2 = inlined_call_operand.hbm [shape: f32[2,8,256], index: 2, kind: output, shape index: {0}]
  %s3 = inlined_call_operand.vmem [shape: f32[2,1,8,2], index: 3, kind: output, shape index: {1}]
  %4 = xla_tuple %s2, %s3
  %s5 = sld [smem:[#allocation0]]
  $region49: #{tpu_custom_call.1} parent=0
    _
  %s7 = ssub.s32 1, %s5
  %s8 = scalar_select 0, %s7, %s5
  $region1: #{tpu_custom_call.1} parent=0
    #allocation2 [shape = 'u8[16384]{0}', space=vmem, size = 0x4000, scoped, tag = 'output window, operand 0']
    #allocation3 [shape = 's32[2]{0}', space=sflag, size = 0x8, scoped, tag = 'scoped memory for tpu_custom_call.1']
    %9 = vsyncpa [#allocation3], 0
    %s10 = scalar_lea.sflag [#allocation3], 1
    %11 = vsyncpa %s10, 0
    loop: start=0, step=1, limit=4
    $region2: #{tpu_custom_call.1} parent=1 // loop_pre_header
      _
    $region3: #{tpu_custom_call.1} parent=1 // loop_header
      %s13 = sphi 0, %s17
      %p14 = scmp.ge.s32.totalorder %s13, 4
      %s20 = sphi 0, %s32
      %s21 = sphi 0, %s28
      %s22 = sphi 0, %s20
      %s23 = sphi 0, %s21
      %s24 = sphi 0, %s22
      %s25 = sphi 0, %s23
      %s37 = sphi 0, %s39
      %s40 = sphi 0, %s37
      %s41 = sphi 0, %s40
      %s57 = sphi 0, %s41
      %s61 = sphi 0, %s61
      %s63 = sphi 0, %s61
      %s64 = sphi 0, %s63
      %s78 = sphi 0, %s64
      %s86 = sphi 0, %s88
      %s89 = sphi 0, %s86
      %s90 = sphi 0, %s89
      %s106 = sphi 0, %s90
      %s114 = sphi 0, %s116
      %s117 = sphi 0, %s114
      %s118 = sphi 0, %s117
      %s134 = sphi 0, %s118
    $region4: #{tpu_custom_call.1} parent=1 // loop_header_branch
      %16 = sbr.rel (%p14) target = $region8
    $region5: #{tpu_custom_call.1} parent=1 // loop_body
      %s18 = ssub.s32 %s13, 1
      %s19 = ssub.s32 %s13, 2
      %s26 = sadd.s32 1, %s21
      %p27 = scmp.ge.s32.totalorder %s26, 1
      %s28 = scalar_select %p27, 0, %s26
      %s29 = sadd.s32 1, %s20
      %s30 = scalar_select %p27, %s29, %s20
      %p31 = scmp.ge.s32.totalorder %s30, 2
      %s32 = scalar_select %p31, 0, %s30
      %s33 = sadd.s32 %s20, %s21
      %s34 = sadd.s32 %s32, %s28
      %s35 = ssub.s32 %s33, %s34
      %p36 = scmp.eq.s32.totalorder %s35, 0
      %s38 = sadd.s32 %s37, 1
      %s39 = scalar_select %p36, %s37, %s38
      %p42 = pneg %p36
      %p43 = scmp.eq.s32.totalorder %s13, 1
      %p44 = por %p42, %p43
      %p45 = scmp.ne.s32.totalorder %s37, %s40
      %p46 = scmp.eq.s32.totalorder %s13, 0
      %p47 = por %p45, %p46
      %p48 = scmp.ne.s32.totalorder %s37, %s40
      %p49 = scmp.eq.s32.totalorder %s18, 1
      %p50 = por %p48, %p49
      %p51 = scmp.ne.s32.totalorder %s40, %s41
      %p52 = scmp.eq.s32.totalorder %s18, 0
      %p53 = por %p51, %p52
      %p54 = scmp.ne.s32.totalorder %s40, %s41
      %p55 = scmp.eq.s32.totalorder %s19, 1
      %p56 = por %p54, %p55
      %p58 = scmp.ne.s32.totalorder %s41, %s57
      %p59 = scmp.eq.s32.totalorder %s19, 0
      %p60 = por %p58, %p59
      %s62 = sadd.s32 %s61, 1
      %p65 = scmp.eq.s32.totalorder %s13, 1
      %p66 = scmp.ne.s32.totalorder %s61, %s63
      %p67 = scmp.eq.s32.totalorder %s13, 0
      %p68 = por %p66, %p67
      %p69 = scmp.ne.s32.totalorder %s61, %s63
      %p70 = scmp.eq.s32.totalorder %s18, 1
      %p71 = por %p69, %p70
      %p72 = scmp.ne.s32.totalorder %s63, %s64
      %p73 = scmp.eq.s32.totalorder %s18, 0
      %p74 = por %p72, %p73
      %p75 = scmp.ne.s32.totalorder %s63, %s64
      %p76 = scmp.eq.s32.totalorder %s19, 1
      %p77 = por %p75, %p76
      %p79 = scmp.ne.s32.totalorder %s64, %s78
      %p80 = scmp.eq.s32.totalorder %s19, 0
      %p81 = por %p79, %p80
      %s82 = ssub.s32 %s20, %s32
      %s83 = ssub.s32 %s21, %s28
      %s84 = sor.u32 %s82, %s83
      %p85 = scmp.eq.s32.totalorder %s84, 0
      %s87 = sadd.s32 %s86, 1
      %s88 = scalar_select %p85, %s86, %s87
      %p91 = pneg %p85
      %p92 = scmp.eq.s32.totalorder %s13, 1
      %p93 = por %p91, %p92
      %p94 = scmp.ne.s32.totalorder %s86, %s89
      %p95 = scmp.eq.s32.totalorder %s13, 0
      %p96 = por %p94, %p95
      %p97 = scmp.ne.s32.totalorder %s86, %s89
      %p98 = scmp.eq.s32.totalorder %s18, 1
      %p99 = por %p97, %p98
      %p100 = scmp.ne.s32.totalorder %s89, %s90
      %p101 = scmp.eq.s32.totalorder %s18, 0
      %p102 = por %p100, %p101
      %p103 = scmp.ne.s32.totalorder %s89, %s90
      %p104 = scmp.eq.s32.totalorder %s19, 1
      %p105 = por %p103, %p104
      %p107 = scmp.ne.s32.totalorder %s90, %s106
      %p108 = scmp.eq.s32.totalorder %s19, 0
      %p109 = por %p107, %p108
      %s110 = ssub.s32 %s20, %s32
      %s111 = ssub.s32 %s21, %s28
      %s112 = sor.u32 %s110, %s111
      %p113 = scmp.eq.s32.totalorder %s112, 0
      %s115 = sadd.s32 %s114, 1
      %s116 = scalar_select %p113, %s114, %s115
      %p119 = pneg %p113
      %p120 = scmp.eq.s32.totalorder %s13, 1
      %p121 = por %p119, %p120
      %p122 = scmp.ne.s32.totalorder %s114, %s117
      %p123 = scmp.eq.s32.totalorder %s13, 0
      %p124 = por %p122, %p123
      %p125 = scmp.ne.s32.totalorder %s114, %s117
      %p126 = scmp.eq.s32.totalorder %s18, 1
      %p127 = por %p125, %p126
      %p128 = scmp.ne.s32.totalorder %s117, %s118
      %p129 = scmp.eq.s32.totalorder %s18, 0
      %p130 = por %p128, %p129
      %p131 = scmp.ne.s32.totalorder %s117, %s118
      %p132 = scmp.eq.s32.totalorder %s19, 1
      %p133 = por %p131, %p132
      %p135 = scmp.ne.s32.totalorder %s118, %s134
      %p136 = scmp.eq.s32.totalorder %s19, 0
      %p137 = por %p135, %p136
      %p138 = scmp.le.s32.totalorder 1, %s13
      %p139 = scmp.lt.s32.totalorder %s13, 3
      %p140 = pnand %p138, %p139
      %p141 = pneg %p140
      // Predicated region
      $region9: #{tpu_custom_call.1} parent=5 // pred_check
        _
      $region10: #{tpu_custom_call.1} parent=5 // pred_check_branch
        %143 = sbr.rel (%p140) target = $region12
      $region11: #{tpu_custom_call.1} parent=5 // pred_region
        %s144 = ssub.s32 %s13, 1
        // Predicated region
        $region13: #{tpu_custom_call.1} parent=11 // pred_check
          %p145 = pneg %p74
        $region14: #{tpu_custom_call.1} parent=11 // pred_check_branch
          %147 = sbr.rel (%p145) target = $region16
        $region15: #{tpu_custom_call.1} parent=11 // pred_region
          _
        $region16: #{tpu_custom_call.1} parent=11 // pred_fallthru
          _
      $region12: #{tpu_custom_call.1} parent=5 // pred_fallthru
        _
      %p148 = scmp.lt.s32.totalorder %s13, 2
      // Predicated region
      $region17: #{tpu_custom_call.1} parent=5 // pred_check
        %p149 = pneg %p148
      $region18: #{tpu_custom_call.1} parent=5 // pred_check_branch
        %151 = sbr.rel (%p149) target = $region20
      $region19: #{tpu_custom_call.1} parent=5 // pred_region
        // Predicated region
        $region21: #{tpu_custom_call.1} parent=19 // pred_check
          %p152 = pneg %p47
        $region22: #{tpu_custom_call.1} parent=19 // pred_check_branch
          %154 = sbr.rel (%p152) target = $region24
        $region23: #{tpu_custom_call.1} parent=19 // pred_region
          %s155 = sadd.s32 %s20, %s21
          %p156 = scmp.lt.s32.totalorder %s155, 1
          %s157 = scalar_select %p156, %s155, 1
          %s158 = smul.addr %s157, 54
          %s159 = smul.addr %s158, 4
          %s160 = scalar_lea.vmem %s0, %s159
          %s161 = sadd.s32 %s20, %s21
        $region24: #{tpu_custom_call.1} parent=19 // pred_fallthru
          _
      $region20: #{tpu_custom_call.1} parent=5 // pred_fallthru
        _
      %p162 = scmp.le.s32.totalorder 1, %s13
      %p163 = scmp.lt.s32.totalorder %s13, 3
      %p164 = pnand %p162, %p163
      %p165 = pneg %p164
      // Predicated region
      $region25: #{tpu_custom_call.1} parent=5 // pred_check
        _
      $region26: #{tpu_custom_call.1} parent=5 // pred_check_branch
        %167 = sbr.rel (%p164) target = $region28
      $region27: #{tpu_custom_call.1} parent=5 // pred_region
        %s168 = ssub.s32 %s13, 1
        %s169 = sadd.s32 %s22, %s23
        %p170 = scmp.lt.s32.totalorder %s169, 1
        %s171 = scalar_select %p170, %s169, 1
        %s172 = smul.addr %s171, 54
        %s173 = smul.addr %s172, 4
        %s174 = scalar_lea.vmem %s0, %s173
        %p175 = pneg %p53
        %p176 = pneg %p50
        %p177 = pneg %p74
        %p178 = pneg %p71
        %p179 = pneg %p102
        %p180 = pneg %p99
        %s181 = sand.u32 %s89, 1
        %s182 = scalar_lea.sflag [#allocation3], %s181
        %s183 = sand.u32 %s89, 1
        %s184 = smul.addr %s183, 16
        %s185 = scalar_lea.vmem [#allocation2], %s184
        %p186 = pneg %p130
        %p187 = pneg %p127
        %p188 = scmp.lt.s32.totalorder %s22, 1
        %s189 = scalar_select %p188, %s22, 1
        %p190 = scmp.lt.s32.totalorder %s23, 0
        %s191 = scalar_select %p190, %s23, 0
        %s192 = sadd.s32 %s191, %s189
        %s193 = smul.addr %s192, 8
        %s194 = scalar_lea.vmem %s3, %s193
        %s195 = sadd.s32 %s22, %s23
        %p196 = scmp.lt.s32.totalorder %s195, 1
        %s197 = scalar_select %p196, %s195, 1
        %s198 = smul.addr %s197, 54
        %s199 = smul.addr %s198, 4
        %s200 = scalar_lea.vmem %s0, %s199
        %s201 = sadd.s32 %s22, %s23
        %s202 = smul.u32 2, %s23
        %p203 = scmp.lt.s32.totalorder %s22, 1
        %s204 = scalar_select %p203, %s22, 1
        %p205 = scmp.lt.s32.totalorder %s23, 0
        %s206 = scalar_select %p205, %s23, 0
        %s207 = sadd.s32 %s206, %s204
        %s208 = smul.addr %s207, 8
        %s209 = scalar_lea.vmem %s3, %s208
        %v211 = vld [vmem:[%s200] sm:$0xf]
        %v212 = vld [vmem:[%s200 + $0x4] sm:$0xf]
        %v213 = vld [vmem:[%s200 + $0xc] sm:$0xf]
        %v214 = vld [vmem:[%s200 + $0x10] sm:$0xf]
        %v215 = vld [vmem:[%s200 + $0x18] sm:$0xf]
        %v216 = vld [vmem:[%s200 + $0x1c] sm:$0xf]
        %v217 = vld [vmem:[%s200 + $0x24] sm:$0xf]
        %v218 = vld [vmem:[%s200 + $0x28] sm:$0xf]
        %v219 = vld [vmem:[%s200 + $0x30] sm:$0xf]
        %v220 = vld [vmem:[%s200 + $0x34] sm:$0xf]
        %v221 = vld [vmem:[%s200 + $0x3c] sm:$0xf]
        %v222 = vld [vmem:[%s200 + $0x40] sm:$0xf]
        %v223 = vld [vmem:[%s200 + $0x48] sm:$0xf]
        %v224 = vld [vmem:[%s200 + $0x4c] sm:$0xf]
        %v225 = vld [vmem:[%s200 + $0x54] sm:$0xf]
        %v226 = vld [vmem:[%s200 + $0x58] sm:$0xf]
        %v227 = vld [vmem:[%s200 + $0x60] sm:$0xf]
        %v228 = vld [vmem:[%s200 + $0x64] sm:$0xf]
        %v229 = vld [vmem:[%s200 + $0x6c] sm:$0xf]
        %v230 = vld [vmem:[%s200 + $0x70] sm:$0xf]
        %v231 = vld [vmem:[%s200 + $0x78] sm:$0xf]
        %v232 = vld [vmem:[%s200 + $0x7c] sm:$0xf]
        %v233 = vld [vmem:[%s200 + $0x84] sm:$0xf]
        %v234 = vld [vmem:[%s200 + $0x88] sm:$0xf]
        %v235 = vld [vmem:[%s200 + $0x90] sm:$0xf]
        %v236 = vld [vmem:[%s200 + $0x94] sm:$0xf]
        %v237 = vld [vmem:[%s200 + $0x9c] sm:$0xf]
        %v238 = vld [vmem:[%s200 + $0xa0] sm:$0xf]
        %v239 = vld [vmem:[%s200 + $0xa8] sm:$0xf]
        %v240 = vld [vmem:[%s200 + $0xac] sm:$0xf]
        %v241 = vld [vmem:[%s200 + $0xb4] sm:$0xf]
        %v242 = vld [vmem:[%s200 + $0xb8] sm:$0xf]
        %v243 = vld [vmem:[%s200 + $0x8] sm:$0x1]
        %v244 = vld [vmem:[%s200 + $0x14] sm:$0x1]
        %v245 = vld [vmem:[%s200 + $0x20] sm:$0x1]
        %v246 = vld [vmem:[%s200 + $0x2c] sm:$0x1]
        %v247 = vld [vmem:[%s200 + $0x38] sm:$0x1]
        %v248 = vld [vmem:[%s200 + $0x44] sm:$0x1]
        %v249 = vld [vmem:[%s200 + $0x50] sm:$0x1]
        %v250 = vld [vmem:[%s200 + $0x5c] sm:$0x1]
        %v251 = vld [vmem:[%s200 + $0x68] sm:$0x1]
        %v252 = vld [vmem:[%s200 + $0x74] sm:$0x1]
        %v253 = vld [vmem:[%s200 + $0x80] sm:$0x1]
        %v254 = vld [vmem:[%s200 + $0x8c] sm:$0x1]
        %v255 = vld [vmem:[%s200 + $0x98] sm:$0x1]
        %v256 = vld [vmem:[%s200 + $0xa4] sm:$0x1]
        %v257 = vld [vmem:[%s200 + $0xb0] sm:$0x1]
        %v258 = vld [vmem:[%s200 + $0xbc] sm:$0x1]
        %v259 = vld [vmem:[%s200] sm:$0xe]
        %v260 = vld [vmem:[%s200 + $0xc] sm:$0xe]
        %v261 = vld [vmem:[%s200 + $0x18] sm:$0xe]
        %v262 = vld [vmem:[%s200 + $0x24] sm:$0xe]
        %v263 = vld [vmem:[%s200 + $0x30] sm:$0xe]
        %v264 = vld [vmem:[%s200 + $0x3c] sm:$0xe]
        %v265 = vld [vmem:[%s200 + $0x48] sm:$0xe]
        %v266 = vld [vmem:[%s200 + $0x54] sm:$0xe]
        %v267 = vld [vmem:[%s200 + $0x60] sm:$0xe]
        %v268 = vld [vmem:[%s200 + $0x6c] sm:$0xe]
        %v269 = vld [vmem:[%s200 + $0x78] sm:$0xe]
        %v270 = vld [vmem:[%s200 + $0x84] sm:$0xe]
        %v271 = vld [vmem:[%s200 + $0x90] sm:$0xe]
        %v272 = vld [vmem:[%s200 + $0x9c] sm:$0xe]
        %v273 = vld [vmem:[%s200 + $0xa8] sm:$0xe]
        %v274 = vld [vmem:[%s200 + $0xb4] sm:$0xe]
        %s275 = scalar_lea.vmem %s200, 12
        %v276 = vld [vmem:[%s275] sm:$0xf]
        %v277 = vld [vmem:[%s275 + $0x4] sm:$0xf]
        %v278 = vld [vmem:[%s275 + $0xc] sm:$0xf]
        %v279 = vld [vmem:[%s275 + $0x10] sm:$0xf]
        %v280 = vld [vmem:[%s275 + $0x18] sm:$0xf]
        %v281 = vld [vmem:[%s275 + $0x1c] sm:$0xf]
        %v282 = vld [vmem:[%s275 + $0x24] sm:$0xf]
        %v283 = vld [vmem:[%s275 + $0x28] sm:$0xf]
        %v284 = vld [vmem:[%s275 + $0x30] sm:$0xf]
        %v285 = vld [vmem:[%s275 + $0x34] sm:$0xf]
        %v286 = vld [vmem:[%s275 + $0x3c] sm:$0xf]
        %v287 = vld [vmem:[%s275 + $0x40] sm:$0xf]
        %v288 = vld [vmem:[%s275 + $0x48] sm:$0xf]
        %v289 = vld [vmem:[%s275 + $0x4c] sm:$0xf]
        %v290 = vld [vmem:[%s275 + $0x54] sm:$0xf]
        %v291 = vld [vmem:[%s275 + $0x58] sm:$0xf]
        %v292 = vld [vmem:[%s275 + $0x60] sm:$0xf]
        %v293 = vld [vmem:[%s275 + $0x64] sm:$0xf]
        %v294 = vld [vmem:[%s275 + $0x6c] sm:$0xf]
        %v295 = vld [vmem:[%s275 + $0x70] sm:$0xf]
        %v296 = vld [vmem:[%s275 + $0x78] sm:$0xf]
        %v297 = vld [vmem:[%s275 + $0x7c] sm:$0xf]
        %v298 = vld [vmem:[%s275 + $0x84] sm:$0xf]
        %v299 = vld [vmem:[%s275 + $0x88] sm:$0xf]
        %v300 = vld [vmem:[%s275 + $0x90] sm:$0xf]
        %v301 = vld [vmem:[%s275 + $0x94] sm:$0xf]
        %v302 = vld [vmem:[%s275 + $0x9c] sm:$0xf]
        %v303 = vld [vmem:[%s275 + $0xa0] sm:$0xf]
        %v304 = vld [vmem:[%s275 + $0xa8] sm:$0xf]
        %v305 = vld [vmem:[%s275 + $0xac] sm:$0xf]
        %v306 = vld [vmem:[%s275 + $0xb4] sm:$0xf]
        %v307 = vld [vmem:[%s275 + $0xb8] sm:$0xf]
        %v308 = vld [vmem:[%s275 + $0x8] sm:$0x1]
        %v309 = vld [vmem:[%s275 + $0x14] sm:$0x1]
        %v310 = vld [vmem:[%s275 + $0x20] sm:$0x1]
        %v311 = vld [vmem:[%s275 + $0x2c] sm:$0x1]
        %v312 = vld [vmem:[%s275 + $0x38] sm:$0x1]
        %v313 = vld [vmem:[%s275 + $0x44] sm:$0x1]
        %v314 = vld [vmem:[%s275 + $0x50] sm:$0x1]
        %v315 = vld [vmem:[%s275 + $0x5c] sm:$0x1]
        %v316 = vld [vmem:[%s275 + $0x68] sm:$0x1]
        %v317 = vld [vmem:[%s275 + $0x74] sm:$0x1]
        %v318 = vld [vmem:[%s275 + $0x80] sm:$0x1]
        %v319 = vld [vmem:[%s275 + $0x8c] sm:$0x1]
        %v320 = vld [vmem:[%s275 + $0x98] sm:$0x1]
        %v321 = vld [vmem:[%s275 + $0xa4] sm:$0x1]
        %v322 = vld [vmem:[%s275 + $0xb0] sm:$0x1]
        %v323 = vld [vmem:[%s275 + $0xbc] sm:$0x1]
        %v324 = vld [vmem:[%s275] sm:$0xe]
        %v325 = vld [vmem:[%s275 + $0xc] sm:$0xe]
        %v326 = vld [vmem:[%s275 + $0x18] sm:$0xe]
        %v327 = vld [vmem:[%s275 + $0x24] sm:$0xe]
        %v328 = vld [vmem:[%s275 + $0x30] sm:$0xe]
        %v329 = vld [vmem:[%s275 + $0x3c] sm:$0xe]
        %v330 = vld [vmem:[%s275 + $0x48] sm:$0xe]
        %v331 = vld [vmem:[%s275 + $0x54] sm:$0xe]
        %v332 = vld [vmem:[%s275 + $0x60] sm:$0xe]
        %v333 = vld [vmem:[%s275 + $0x6c] sm:$0xe]
        %v334 = vld [vmem:[%s275 + $0x78] sm:$0xe]
        %v335 = vld [vmem:[%s275 + $0x84] sm:$0xe]
        %v336 = vld [vmem:[%s275 + $0x90] sm:$0xe]
        %v337 = vld [vmem:[%s275 + $0x9c] sm:$0xe]
        %v338 = vld [vmem:[%s275 + $0xa8] sm:$0xe]
        %v339 = vld [vmem:[%s275 + $0xb4] sm:$0xe]
        %s340 = scalar_lea.vmem %s200, 24
        %v341 = vld [vmem:[%s340] sm:$0xf]
        %v342 = vld [vmem:[%s340 + $0x4] sm:$0xf]
        %v343 = vld [vmem:[%s340 + $0xc] sm:$0xf]
        %v344 = vld [vmem:[%s340 + $0x10] sm:$0xf]
        %v345 = vld [vmem:[%s340 + $0x18] sm:$0xf]
        %v346 = vld [vmem:[%s340 + $0x1c] sm:$0xf]
        %v347 = vld [vmem:[%s340 + $0x24] sm:$0xf]
        %v348 = vld [vmem:[%s340 + $0x28] sm:$0xf]
        %v349 = vld [vmem:[%s340 + $0x30] sm:$0xf]
        %v350 = vld [vmem:[%s340 + $0x34] sm:$0xf]
        %v351 = vld [vmem:[%s340 + $0x3c] sm:$0xf]
        %v352 = vld [vmem:[%s340 + $0x40] sm:$0xf]
        %v353 = vld [vmem:[%s340 + $0x48] sm:$0xf]
        %v354 = vld [vmem:[%s340 + $0x4c] sm:$0xf]
        %v355 = vld [vmem:[%s340 + $0x54] sm:$0xf]
        %v356 = vld [vmem:[%s340 + $0x58] sm:$0xf]
        %v357 = vld [vmem:[%s340 + $0x60] sm:$0xf]
        %v358 = vld [vmem:[%s340 + $0x64] sm:$0xf]
        %v359 = vld [vmem:[%s340 + $0x6c] sm:$0xf]
        %v360 = vld [vmem:[%s340 + $0x70] sm:$0xf]
        %v361 = vld [vmem:[%s340 + $0x78] sm:$0xf]
        %v362 = vld [vmem:[%s340 + $0x7c] sm:$0xf]
        %v363 = vld [vmem:[%s340 + $0x84] sm:$0xf]
        %v364 = vld [vmem:[%s340 + $0x88] sm:$0xf]
        %v365 = vld [vmem:[%s340 + $0x90] sm:$0xf]
        %v366 = vld [vmem:[%s340 + $0x94] sm:$0xf]
        %v367 = vld [vmem:[%s340 + $0x9c] sm:$0xf]
        %v368 = vld [vmem:[%s340 + $0xa0] sm:$0xf]
        %v369 = vld [vmem:[%s340 + $0xa8] sm:$0xf]
        %v370 = vld [vmem:[%s340 + $0xac] sm:$0xf]
        %v371 = vld [vmem:[%s340 + $0xb4] sm:$0xf]
        %v372 = vld [vmem:[%s340 + $0xb8] sm:$0xf]
        %v373 = vld [vmem:[%s340 + $0x8] sm:$0x1]
        %v374 = vld [vmem:[%s340 + $0x14] sm:$0x1]
        %v375 = vld [vmem:[%s340 + $0x20] sm:$0x1]
        %v376 = vld [vmem:[%s340 + $0x2c] sm:$0x1]
        %v377 = vld [vmem:[%s340 + $0x38] sm:$0x1]
        %v378 = vld [vmem:[%s340 + $0x44] sm:$0x1]
        %v379 = vld [vmem:[%s340 + $0x50] sm:$0x1]
        %v380 = vld [vmem:[%s340 + $0x5c] sm:$0x1]
        %v381 = vld [vmem:[%s340 + $0x68] sm:$0x1]
        %v382 = vld [vmem:[%s340 + $0x74] sm:$0x1]
        %v383 = vld [vmem:[%s340 + $0x80] sm:$0x1]
        %v384 = vld [vmem:[%s340 + $0x8c] sm:$0x1]
        %v385 = vld [vmem:[%s340 + $0x98] sm:$0x1]
        %v386 = vld [vmem:[%s340 + $0xa4] sm:$0x1]
        %v387 = vld [vmem:[%s340 + $0xb0] sm:$0x1]
        %v388 = vld [vmem:[%s340 + $0xbc] sm:$0x1]
        %v389 = vld [vmem:[%s340] sm:$0xe]
        %v390 = vld [vmem:[%s340 + $0xc] sm:$0xe]
        %v391 = vld [vmem:[%s340 + $0x18] sm:$0xe]
        %v392 = vld [vmem:[%s340 + $0x24] sm:$0xe]
        %v393 = vld [vmem:[%s340 + $0x30] sm:$0xe]
        %v394 = vld [vmem:[%s340 + $0x3c] sm:$0xe]
        %v395 = vld [vmem:[%s340 + $0x48] sm:$0xe]
        %v396 = vld [vmem:[%s340 + $0x54] sm:$0xe]
        %v397 = vld [vmem:[%s340 + $0x60] sm:$0xe]
        %v398 = vld [vmem:[%s340 + $0x6c] sm:$0xe]
        %v399 = vld [vmem:[%s340 + $0x78] sm:$0xe]
        %v400 = vld [vmem:[%s340 + $0x84] sm:$0xe]
        %v401 = vld [vmem:[%s340 + $0x90] sm:$0xe]
        %v402 = vld [vmem:[%s340 + $0x9c] sm:$0xe]
        %v403 = vld [vmem:[%s340 + $0xa8] sm:$0xe]
        %v404 = vld [vmem:[%s340 + $0xb4] sm:$0xe]
        %v437 = vunpack.c.l.b16 %v211
        %v438 = vunpack.c.l.b16 %v212
        %v439 = vunpack.c.l.b16 %v213
        %v440 = vunpack.c.l.b16 %v214
        %v441 = vunpack.c.l.b16 %v215
        %v442 = vunpack.c.l.b16 %v216
        %v443 = vunpack.c.l.b16 %v217
        %v444 = vunpack.c.l.b16 %v218
        %v445 = vunpack.c.l.b16 %v219
        %v446 = vunpack.c.l.b16 %v220
        %v447 = vunpack.c.l.b16 %v221
        %v448 = vunpack.c.l.b16 %v222
        %v449 = vunpack.c.l.b16 %v223
        %v450 = vunpack.c.l.b16 %v224
        %v451 = vunpack.c.l.b16 %v225
        %v452 = vunpack.c.l.b16 %v226
        %v453 = vunpack.c.l.b16 %v227
        %v454 = vunpack.c.l.b16 %v228
        %v455 = vunpack.c.l.b16 %v229
        %v456 = vunpack.c.l.b16 %v230
        %v457 = vunpack.c.l.b16 %v231
        %v458 = vunpack.c.l.b16 %v232
        %v459 = vunpack.c.l.b16 %v233
        %v460 = vunpack.c.l.b16 %v234
        %v461 = vunpack.c.l.b16 %v235
        %v462 = vunpack.c.l.b16 %v236
        %v463 = vunpack.c.l.b16 %v237
        %v464 = vunpack.c.l.b16 %v238
        %v465 = vunpack.c.l.b16 %v239
        %v466 = vunpack.c.l.b16 %v240
        %v467 = vunpack.c.l.b16 %v241
        %v468 = vunpack.c.l.b16 %v242
        %v469 = vpack.c.b16 %v438, %v437
        %v470 = vpack.c.b16 %v440, %v439
        %v471 = vpack.c.b16 %v442, %v441
        %v472 = vpack.c.b16 %v444, %v443
        %v473 = vpack.c.b16 %v446, %v445
        %v474 = vpack.c.b16 %v448, %v447
        %v475 = vpack.c.b16 %v450, %v449
        %v476 = vpack.c.b16 %v452, %v451
        %v477 = vpack.c.b16 %v454, %v453
        %v478 = vpack.c.b16 %v456, %v455
        %v479 = vpack.c.b16 %v458, %v457
        %v480 = vpack.c.b16 %v460, %v459
        %v481 = vpack.c.b16 %v462, %v461
        %v482 = vpack.c.b16 %v464, %v463
        %v483 = vpack.c.b16 %v466, %v465
        %v484 = vpack.c.b16 %v468, %v467
        %v501 = vunpack.c.l.b16 %v243
        %v502 = vunpack.c.l.b16 %v244
        %v503 = vunpack.c.l.b16 %v245
        %v504 = vunpack.c.l.b16 %v246
        %v505 = vunpack.c.l.b16 %v247
        %v506 = vunpack.c.l.b16 %v248
        %v507 = vunpack.c.l.b16 %v249
        %v508 = vunpack.c.l.b16 %v250
        %v509 = vunpack.c.l.b16 %v251
        %v510 = vunpack.c.l.b16 %v252
        %v511 = vunpack.c.l.b16 %v253
        %v512 = vunpack.c.l.b16 %v254
        %v513 = vunpack.c.l.b16 %v255
        %v514 = vunpack.c.l.b16 %v256
        %v515 = vunpack.c.l.b16 %v257
        %v516 = vunpack.c.l.b16 %v258
        %v517 = vpack.c.b16 %v501, %v501
        %v518 = vpack.c.b16 %v502, %v502
        %v519 = vpack.c.b16 %v503, %v503
        %v520 = vpack.c.b16 %v504, %v504
        %v521 = vpack.c.b16 %v505, %v505
        %v522 = vpack.c.b16 %v506, %v506
        %v523 = vpack.c.b16 %v507, %v507
        %v524 = vpack.c.b16 %v508, %v508
        %v525 = vpack.c.b16 %v509, %v509
        %v526 = vpack.c.b16 %v510, %v510
        %v527 = vpack.c.b16 %v511, %v511
        %v528 = vpack.c.b16 %v512, %v512
        %v529 = vpack.c.b16 %v513, %v513
        %v530 = vpack.c.b16 %v514, %v514
        %v531 = vpack.c.b16 %v515, %v515
        %v532 = vpack.c.b16 %v516, %v516
        %vm533 = vsmask.f32 7424
        %v535 = vshrl.u32 %v469, 16
        %v537 = vshll.u32 %v469, 16
        %v539 = vrot.slane %v537, 1
        %v540 = vor.u32 %v535, %v539
        %v542 = vshll.u32 %v517, 16
        %v544 = vrot.slane %v542, 1
        %v545 = vsel %vm533, %v540, %v544
        %v547 = vshrl.u32 %v470, 16
        %v549 = vshll.u32 %v470, 16
        %v551 = vrot.slane %v549, 1
        %v552 = vor.u32 %v547, %v551
        %v554 = vshll.u32 %v518, 16
        %v556 = vrot.slane %v554, 1
        %v557 = vsel %vm533, %v552, %v556
        %v559 = vshrl.u32 %v471, 16
        %v561 = vshll.u32 %v471, 16
        %v563 = vrot.slane %v561, 1
        %v564 = vor.u32 %v559, %v563
        %v566 = vshll.u32 %v519, 16
        %v568 = vrot.slane %v566, 1
        %v569 = vsel %vm533, %v564, %v568
        %v571 = vshrl.u32 %v472, 16
        %v573 = vshll.u32 %v472, 16
        %v575 = vrot.slane %v573, 1
        %v576 = vor.u32 %v571, %v575
        %v578 = vshll.u32 %v520, 16
        %v580 = vrot.slane %v578, 1
        %v581 = vsel %vm533, %v576, %v580
        %v583 = vshrl.u32 %v473, 16
        %v585 = vshll.u32 %v473, 16
        %v587 = vrot.slane %v585, 1
        %v588 = vor.u32 %v583, %v587
        %v590 = vshll.u32 %v521, 16
        %v592 = vrot.slane %v590, 1
        %v593 = vsel %vm533, %v588, %v592
        %v595 = vshrl.u32 %v474, 16
        %v597 = vshll.u32 %v474, 16
        %v599 = vrot.slane %v597, 1
        %v600 = vor.u32 %v595, %v599
        %v602 = vshll.u32 %v522, 16
        %v604 = vrot.slane %v602, 1
        %v605 = vsel %vm533, %v600, %v604
        %v607 = vshrl.u32 %v475, 16
        %v609 = vshll.u32 %v475, 16
        %v611 = vrot.slane %v609, 1
        %v612 = vor.u32 %v607, %v611
        %v614 = vshll.u32 %v523, 16
        %v616 = vrot.slane %v614, 1
        %v617 = vsel %vm533, %v612, %v616
        %v619 = vshrl.u32 %v476, 16
        %v621 = vshll.u32 %v476, 16
        %v623 = vrot.slane %v621, 1
        %v624 = vor.u32 %v619, %v623
        %v626 = vshll.u32 %v524, 16
        %v628 = vrot.slane %v626, 1
        %v629 = vsel %vm533, %v624, %v628
        %v631 = vshrl.u32 %v477, 16
        %v633 = vshll.u32 %v477, 16
        %v635 = vrot.slane %v633, 1
        %v636 = vor.u32 %v631, %v635
        %v638 = vshll.u32 %v525, 16
        %v640 = vrot.slane %v638, 1
        %v641 = vsel %vm533, %v636, %v640
        %v643 = vshrl.u32 %v478, 16
        %v645 = vshll.u32 %v478, 16
        %v647 = vrot.slane %v645, 1
        %v648 = vor.u32 %v643, %v647
        %v650 = vshll.u32 %v526, 16
        %v652 = vrot.slane %v650, 1
        %v653 = vsel %vm533, %v648, %v652
        %v655 = vshrl.u32 %v479, 16
        %v657 = vshll.u32 %v479, 16
        %v659 = vrot.slane %v657, 1
        %v660 = vor.u32 %v655, %v659
        %v662 = vshll.u32 %v527, 16
        %v664 = vrot.slane %v662, 1
        %v665 = vsel %vm533, %v660, %v664
        %v667 = vshrl.u32 %v480, 16
        %v669 = vshll.u32 %v480, 16
        %v671 = vrot.slane %v669, 1
        %v672 = vor.u32 %v667, %v671
        %v674 = vshll.u32 %v528, 16
        %v676 = vrot.slane %v674, 1
        %v677 = vsel %vm533, %v672, %v676
        %v679 = vshrl.u32 %v481, 16
        %v681 = vshll.u32 %v481, 16
        %v683 = vrot.slane %v681, 1
        %v684 = vor.u32 %v679, %v683
        %v686 = vshll.u32 %v529, 16
        %v688 = vrot.slane %v686, 1
        %v689 = vsel %vm533, %v684, %v688
        %v691 = vshrl.u32 %v482, 16
        %v693 = vshll.u32 %v482, 16
        %v695 = vrot.slane %v693, 1
        %v696 = vor.u32 %v691, %v695
        %v698 = vshll.u32 %v530, 16
        %v700 = vrot.slane %v698, 1
        %v701 = vsel %vm533, %v696, %v700
        %v703 = vshrl.u32 %v483, 16
        %v705 = vshll.u32 %v483, 16
        %v707 = vrot.slane %v705, 1
        %v708 = vor.u32 %v703, %v707
        %v710 = vshll.u32 %v531, 16
        %v712 = vrot.slane %v710, 1
        %v713 = vsel %vm533, %v708, %v712
        %v715 = vshrl.u32 %v484, 16
        %v717 = vshll.u32 %v484, 16
        %v719 = vrot.slane %v717, 1
        %v720 = vor.u32 %v715, %v719
        %v722 = vshll.u32 %v532, 16
        %v724 = vrot.slane %v722, 1
        %v725 = vsel %vm533, %v720, %v724
        %726 = vrot.lane.b32.xlu0 %v545, 4
        %v727 = vpop.permute.xlu0 %726
        %728 = vrot.lane.b32.xlu0 %v557, 4
        %v729 = vpop.permute.xlu0 %728
        %730 = vrot.lane.b32.xlu0 %v569, 4
        %v731 = vpop.permute.xlu0 %730
        %732 = vrot.lane.b32.xlu0 %v581, 4
        %v733 = vpop.permute.xlu0 %732
        %734 = vrot.lane.b32.xlu0 %v593, 4
        %v735 = vpop.permute.xlu0 %734
        %736 = vrot.lane.b32.xlu0 %v605, 4
        %v737 = vpop.permute.xlu0 %736
        %738 = vrot.lane.b32.xlu0 %v617, 4
        %v739 = vpop.permute.xlu0 %738
        %740 = vrot.lane.b32.xlu0 %v629, 4
        %v741 = vpop.permute.xlu0 %740
        %742 = vrot.lane.b32.xlu0 %v641, 4
        %v743 = vpop.permute.xlu0 %742
        %744 = vrot.lane.b32.xlu0 %v653, 4
        %v745 = vpop.permute.xlu0 %744
        %746 = vrot.lane.b32.xlu0 %v665, 4
        %v747 = vpop.permute.xlu0 %746
        %748 = vrot.lane.b32.xlu0 %v677, 4
        %v749 = vpop.permute.xlu0 %748
        %750 = vrot.lane.b32.xlu0 %v689, 4
        %v751 = vpop.permute.xlu0 %750
        %752 = vrot.lane.b32.xlu0 %v701, 4
        %v753 = vpop.permute.xlu0 %752
        %754 = vrot.lane.b32.xlu0 %v713, 4
        %v755 = vpop.permute.xlu0 %754
        %756 = vrot.lane.b32.xlu0 %v725, 4
        %v757 = vpop.permute.xlu0 %756
        %v774 = vunpack.c.l.b16 %v259
        %v775 = vunpack.c.l.b16 %v260
        %v776 = vunpack.c.l.b16 %v261
        %v777 = vunpack.c.l.b16 %v262
        %v778 = vunpack.c.l.b16 %v263
        %v779 = vunpack.c.l.b16 %v264
        %v780 = vunpack.c.l.b16 %v265
        %v781 = vunpack.c.l.b16 %v266
        %v782 = vunpack.c.l.b16 %v267
        %v783 = vunpack.c.l.b16 %v268
        %v784 = vunpack.c.l.b16 %v269
        %v785 = vunpack.c.l.b16 %v270
        %v786 = vunpack.c.l.b16 %v271
        %v787 = vunpack.c.l.b16 %v272
        %v788 = vunpack.c.l.b16 %v273
        %v789 = vunpack.c.l.b16 %v274
        %v790 = vpack.c.b16 %v438, %v774
        %v791 = vpack.c.b16 %v440, %v775
        %v792 = vpack.c.b16 %v442, %v776
        %v793 = vpack.c.b16 %v444, %v777
        %v794 = vpack.c.b16 %v446, %v778
        %v795 = vpack.c.b16 %v448, %v779
        %v796 = vpack.c.b16 %v450, %v780
        %v797 = vpack.c.b16 %v452, %v781
        %v798 = vpack.c.b16 %v454, %v782
        %v799 = vpack.c.b16 %v456, %v783
        %v800 = vpack.c.b16 %v458, %v784
        %v801 = vpack.c.b16 %v460, %v785
        %v802 = vpack.c.b16 %v462, %v786
        %v803 = vpack.c.b16 %v464, %v787
        %v804 = vpack.c.b16 %v466, %v788
        %v805 = vpack.c.b16 %v468, %v789
        %vm806 = vcmask 1046528
        %v807 = vrot.slane %v790, 1
        %v808 = vrot.slane %v517, 1
        %v809 = vsel %vm806, %v807, %v808
        %v810 = vrot.slane %v791, 1
        %v811 = vrot.slane %v518, 1
        %v812 = vsel %vm806, %v810, %v811
        %v813 = vrot.slane %v792, 1
        %v814 = vrot.slane %v519, 1
        %v815 = vsel %vm806, %v813, %v814
        %v816 = vrot.slane %v793, 1
        %v817 = vrot.slane %v520, 1
        %v818 = vsel %vm806, %v816, %v817
        %v819 = vrot.slane %v794, 1
        %v820 = vrot.slane %v521, 1
        %v821 = vsel %vm806, %v819, %v820
        %v822 = vrot.slane %v795, 1
        %v823 = vrot.slane %v522, 1
        %v824 = vsel %vm806, %v822, %v823
        %v825 = vrot.slane %v796, 1
        %v826 = vrot.slane %v523, 1
        %v827 = vsel %vm806, %v825, %v826
        %v828 = vrot.slane %v797, 1
        %v829 = vrot.slane %v524, 1
        %v830 = vsel %vm806, %v828, %v829
        %v831 = vrot.slane %v798, 1
        %v832 = vrot.slane %v525, 1
        %v833 = vsel %vm806, %v831, %v832
        %v834 = vrot.slane %v799, 1
        %v835 = vrot.slane %v526, 1
        %v836 = vsel %vm806, %v834, %v835
        %v837 = vrot.slane %v800, 1
        %v838 = vrot.slane %v527, 1
        %v839 = vsel %vm806, %v837, %v838
        %v840 = vrot.slane %v801, 1
        %v841 = vrot.slane %v528, 1
        %v842 = vsel %vm806, %v840, %v841
        %v843 = vrot.slane %v802, 1
        %v844 = vrot.slane %v529, 1
        %v845 = vsel %vm806, %v843, %v844
        %v846 = vrot.slane %v803, 1
        %v847 = vrot.slane %v530, 1
        %v848 = vsel %vm806, %v846, %v847
        %v849 = vrot.slane %v804, 1
        %v850 = vrot.slane %v531, 1
        %v851 = vsel %vm806, %v849, %v850
        %v852 = vrot.slane %v805, 1
        %v853 = vrot.slane %v532, 1
        %v854 = vsel %vm806, %v852, %v853
        %855 = vrot.lane.b32.xlu0 %v809, 8
        %v856 = vpop.permute.xlu0 %855
        %857 = vrot.lane.b32.xlu0 %v812, 8
        %v858 = vpop.permute.xlu0 %857
        %859 = vrot.lane.b32.xlu0 %v815, 8
        %v860 = vpop.permute.xlu0 %859
        %861 = vrot.lane.b32.xlu0 %v818, 8
        %v862 = vpop.permute.xlu0 %861
        %863 = vrot.lane.b32.xlu0 %v821, 8
        %v864 = vpop.permute.xlu0 %863
        %865 = vrot.lane.b32.xlu0 %v824, 8
        %v866 = vpop.permute.xlu0 %865
        %867 = vrot.lane.b32.xlu0 %v827, 8
        %v868 = vpop.permute.xlu0 %867
        %869 = vrot.lane.b32.xlu0 %v830, 8
        %v870 = vpop.permute.xlu0 %869
        %871 = vrot.lane.b32.xlu0 %v833, 8
        %v872 = vpop.permute.xlu0 %871
        %873 = vrot.lane.b32.xlu0 %v836, 8
        %v874 = vpop.permute.xlu0 %873
        %875 = vrot.lane.b32.xlu0 %v839, 8
        %v876 = vpop.permute.xlu0 %875
        %877 = vrot.lane.b32.xlu0 %v842, 8
        %v878 = vpop.permute.xlu0 %877
        %879 = vrot.lane.b32.xlu0 %v845, 8
        %v880 = vpop.permute.xlu0 %879
        %881 = vrot.lane.b32.xlu0 %v848, 8
        %v882 = vpop.permute.xlu0 %881
        %883 = vrot.lane.b32.xlu0 %v851, 8
        %v884 = vpop.permute.xlu0 %883
        %885 = vrot.lane.b32.xlu0 %v854, 8
        %v886 = vpop.permute.xlu0 %885
        %v919 = vunpack.c.l.b16 %v276
        %v920 = vunpack.c.l.b16 %v277
        %v921 = vunpack.c.l.b16 %v278
        %v922 = vunpack.c.l.b16 %v279
        %v923 = vunpack.c.l.b16 %v280
        %v924 = vunpack.c.l.b16 %v281
        %v925 = vunpack.c.l.b16 %v282
        %v926 = vunpack.c.l.b16 %v283
        %v927 = vunpack.c.l.b16 %v284
        %v928 = vunpack.c.l.b16 %v285
        %v929 = vunpack.c.l.b16 %v286
        %v930 = vunpack.c.l.b16 %v287
        %v931 = vunpack.c.l.b16 %v288
        %v932 = vunpack.c.l.b16 %v289
        %v933 = vunpack.c.l.b16 %v290
        %v934 = vunpack.c.l.b16 %v291
        %v935 = vunpack.c.l.b16 %v292
        %v936 = vunpack.c.l.b16 %v293
        %v937 = vunpack.c.l.b16 %v294
        %v938 = vunpack.c.l.b16 %v295
        %v939 = vunpack.c.l.b16 %v296
        %v940 = vunpack.c.l.b16 %v297
        %v941 = vunpack.c.l.b16 %v298
        %v942 = vunpack.c.l.b16 %v299
        %v943 = vunpack.c.l.b16 %v300
        %v944 = vunpack.c.l.b16 %v301
        %v945 = vunpack.c.l.b16 %v302
        %v946 = vunpack.c.l.b16 %v303
        %v947 = vunpack.c.l.b16 %v304
        %v948 = vunpack.c.l.b16 %v305
        %v949 = vunpack.c.l.b16 %v306
        %v950 = vunpack.c.l.b16 %v307
        %v951 = vpack.c.b16 %v920, %v919
        %v952 = vpack.c.b16 %v922, %v921
        %v953 = vpack.c.b16 %v924, %v923
        %v954 = vpack.c.b16 %v926, %v925
        %v955 = vpack.c.b16 %v928, %v927
        %v956 = vpack.c.b16 %v930, %v929
        %v957 = vpack.c.b16 %v932, %v931
        %v958 = vpack.c.b16 %v934, %v933
        %v959 = vpack.c.b16 %v936, %v935
        %v960 = vpack.c.b16 %v938, %v937
        %v961 = vpack.c.b16 %v940, %v939
        %v962 = vpack.c.b16 %v942, %v941
        %v963 = vpack.c.b16 %v944, %v943
        %v964 = vpack.c.b16 %v946, %v945
        %v965 = vpack.c.b16 %v948, %v947
        %v966 = vpack.c.b16 %v950, %v949
        %967 = vrot.lane.b32.xlu0 %v951, 12
        %v968 = vpop.permute.xlu0 %967
        %969 = vrot.lane.b32.xlu0 %v952, 12
        %v970 = vpop.permute.xlu0 %969
        %971 = vrot.lane.b32.xlu0 %v953, 12
        %v972 = vpop.permute.xlu0 %971
        %973 = vrot.lane.b32.xlu0 %v954, 12
        %v974 = vpop.permute.xlu0 %973
        %975 = vrot.lane.b32.xlu0 %v955, 12
        %v976 = vpop.permute.xlu0 %975
        %977 = vrot.lane.b32.xlu0 %v956, 12
        %v978 = vpop.permute.xlu0 %977
        %979 = vrot.lane.b32.xlu0 %v957, 12
        %v980 = vpop.permute.xlu0 %979
        %981 = vrot.lane.b32.xlu0 %v958, 12
        %v982 = vpop.permute.xlu0 %981
        %983 = vrot.lane.b32.xlu0 %v959, 12
        %v984 = vpop.permute.xlu0 %983
        %985 = vrot.lane.b32.xlu0 %v960, 12
        %v986 = vpop.permute.xlu0 %985
        %987 = vrot.lane.b32.xlu0 %v961, 12
        %v988 = vpop.permute.xlu0 %987
        %989 = vrot.lane.b32.xlu0 %v962, 12
        %v990 = vpop.permute.xlu0 %989
        %991 = vrot.lane.b32.xlu0 %v963, 12
        %v992 = vpop.permute.xlu0 %991
        %993 = vrot.lane.b32.xlu0 %v964, 12
        %v994 = vpop.permute.xlu0 %993
        %995 = vrot.lane.b32.xlu0 %v965, 12
        %v996 = vpop.permute.xlu0 %995
        %997 = vrot.lane.b32.xlu0 %v966, 12
        %v998 = vpop.permute.xlu0 %997
        %v1015 = vunpack.c.l.b16 %v308
        %v1016 = vunpack.c.l.b16 %v309
        %v1017 = vunpack.c.l.b16 %v310
        %v1018 = vunpack.c.l.b16 %v311
        %v1019 = vunpack.c.l.b16 %v312
        %v1020 = vunpack.c.l.b16 %v313
        %v1021 = vunpack.c.l.b16 %v314
        %v1022 = vunpack.c.l.b16 %v315
        %v1023 = vunpack.c.l.b16 %v316
        %v1024 = vunpack.c.l.b16 %v317
        %v1025 = vunpack.c.l.b16 %v318
        %v1026 = vunpack.c.l.b16 %v319
        %v1027 = vunpack.c.l.b16 %v320
        %v1028 = vunpack.c.l.b16 %v321
        %v1029 = vunpack.c.l.b16 %v322
        %v1030 = vunpack.c.l.b16 %v323
        %v1031 = vpack.c.b16 %v1015, %v1015
        %v1032 = vpack.c.b16 %v1016, %v1016
        %v1033 = vpack.c.b16 %v1017, %v1017
        %v1034 = vpack.c.b16 %v1018, %v1018
        %v1035 = vpack.c.b16 %v1019, %v1019
        %v1036 = vpack.c.b16 %v1020, %v1020
        %v1037 = vpack.c.b16 %v1021, %v1021
        %v1038 = vpack.c.b16 %v1022, %v1022
        %v1039 = vpack.c.b16 %v1023, %v1023
        %v1040 = vpack.c.b16 %v1024, %v1024
        %v1041 = vpack.c.b16 %v1025, %v1025
        %v1042 = vpack.c.b16 %v1026, %v1026
        %v1043 = vpack.c.b16 %v1027, %v1027
        %v1044 = vpack.c.b16 %v1028, %v1028
        %v1045 = vpack.c.b16 %v1029, %v1029
        %v1046 = vpack.c.b16 %v1030, %v1030
        %v1048 = vshrl.u32 %v951, 16
        %v1050 = vshll.u32 %v951, 16
        %v1052 = vrot.slane %v1050, 1
        %v1053 = vor.u32 %v1048, %v1052
        %v1055 = vshll.u32 %v1031, 16
        %v1057 = vrot.slane %v1055, 1
        %v1058 = vsel %vm533, %v1053, %v1057
        %v1060 = vshrl.u32 %v952, 16
        %v1062 = vshll.u32 %v952, 16
        %v1064 = vrot.slane %v1062, 1
        %v1065 = vor.u32 %v1060, %v1064
        %v1067 = vshll.u32 %v1032, 16
        %v1069 = vrot.slane %v1067, 1
        %v1070 = vsel %vm533, %v1065, %v1069
        %v1072 = vshrl.u32 %v953, 16
        %v1074 = vshll.u32 %v953, 16
        %v1076 = vrot.slane %v1074, 1
        %v1077 = vor.u32 %v1072, %v1076
        %v1079 = vshll.u32 %v1033, 16
        %v1081 = vrot.slane %v1079, 1
        %v1082 = vsel %vm533, %v1077, %v1081
        %v1084 = vshrl.u32 %v954, 16
        %v1086 = vshll.u32 %v954, 16
        %v1088 = vrot.slane %v1086, 1
        %v1089 = vor.u32 %v1084, %v1088
        %v1091 = vshll.u32 %v1034, 16
        %v1093 = vrot.slane %v1091, 1
        %v1094 = vsel %vm533, %v1089, %v1093
        %v1096 = vshrl.u32 %v955, 16
        %v1098 = vshll.u32 %v955, 16
        %v1100 = vrot.slane %v1098, 1
        %v1101 = vor.u32 %v1096, %v1100
        %v1103 = vshll.u32 %v1035, 16
        %v1105 = vrot.slane %v1103, 1
        %v1106 = vsel %vm533, %v1101, %v1105
        %v1108 = vshrl.u32 %v956, 16
        %v1110 = vshll.u32 %v956, 16
        %v1112 = vrot.slane %v1110, 1
        %v1113 = vor.u32 %v1108, %v1112
        %v1115 = vshll.u32 %v1036, 16
        %v1117 = vrot.slane %v1115, 1
        %v1118 = vsel %vm533, %v1113, %v1117
        %v1120 = vshrl.u32 %v957, 16
        %v1122 = vshll.u32 %v957, 16
        %v1124 = vrot.slane %v1122, 1
        %v1125 = vor.u32 %v1120, %v1124
        %v1127 = vshll.u32 %v1037, 16
        %v1129 = vrot.slane %v1127, 1
        %v1130 = vsel %vm533, %v1125, %v1129
        %v1132 = vshrl.u32 %v958, 16
        %v1134 = vshll.u32 %v958, 16
        %v1136 = vrot.slane %v1134, 1
        %v1137 = vor.u32 %v1132, %v1136
        %v1139 = vshll.u32 %v1038, 16
        %v1141 = vrot.slane %v1139, 1
        %v1142 = vsel %vm533, %v1137, %v1141
        %v1144 = vshrl.u32 %v959, 16
        %v1146 = vshll.u32 %v959, 16
        %v1148 = vrot.slane %v1146, 1
        %v1149 = vor.u32 %v1144, %v1148
        %v1151 = vshll.u32 %v1039, 16
        %v1153 = vrot.slane %v1151, 1
        %v1154 = vsel %vm533, %v1149, %v1153
        %v1156 = vshrl.u32 %v960, 16
        %v1158 = vshll.u32 %v960, 16
        %v1160 = vrot.slane %v1158, 1
        %v1161 = vor.u32 %v1156, %v1160
        %v1163 = vshll.u32 %v1040, 16
        %v1165 = vrot.slane %v1163, 1
        %v1166 = vsel %vm533, %v1161, %v1165
        %v1168 = vshrl.u32 %v961, 16
        %v1170 = vshll.u32 %v961, 16
        %v1172 = vrot.slane %v1170, 1
        %v1173 = vor.u32 %v1168, %v1172
        %v1175 = vshll.u32 %v1041, 16
        %v1177 = vrot.slane %v1175, 1
        %v1178 = vsel %vm533, %v1173, %v1177
        %v1180 = vshrl.u32 %v962, 16
        %v1182 = vshll.u32 %v962, 16
        %v1184 = vrot.slane %v1182, 1
        %v1185 = vor.u32 %v1180, %v1184
        %v1187 = vshll.u32 %v1042, 16
        %v1189 = vrot.slane %v1187, 1
        %v1190 = vsel %vm533, %v1185, %v1189
        %v1192 = vshrl.u32 %v963, 16
        %v1194 = vshll.u32 %v963, 16
        %v1196 = vrot.slane %v1194, 1
        %v1197 = vor.u32 %v1192, %v1196
        %v1199 = vshll.u32 %v1043, 16
        %v1201 = vrot.slane %v1199, 1
        %v1202 = vsel %vm533, %v1197, %v1201
        %v1204 = vshrl.u32 %v964, 16
        %v1206 = vshll.u32 %v964, 16
        %v1208 = vrot.slane %v1206, 1
        %v1209 = vor.u32 %v1204, %v1208
        %v1211 = vshll.u32 %v1044, 16
        %v1213 = vrot.slane %v1211, 1
        %v1214 = vsel %vm533, %v1209, %v1213
        %v1216 = vshrl.u32 %v965, 16
        %v1218 = vshll.u32 %v965, 16
        %v1220 = vrot.slane %v1218, 1
        %v1221 = vor.u32 %v1216, %v1220
        %v1223 = vshll.u32 %v1045, 16
        %v1225 = vrot.slane %v1223, 1
        %v1226 = vsel %vm533, %v1221, %v1225
        %v1228 = vshrl.u32 %v966, 16
        %v1230 = vshll.u32 %v966, 16
        %v1232 = vrot.slane %v1230, 1
        %v1233 = vor.u32 %v1228, %v1232
        %v1235 = vshll.u32 %v1046, 16
        %v1237 = vrot.slane %v1235, 1
        %v1238 = vsel %vm533, %v1233, %v1237
        %1239 = vrot.lane.b32.xlu0 %v1058, 16
        %v1240 = vpop.permute.xlu0 %1239
        %1241 = vrot.lane.b32.xlu0 %v1070, 16
        %v1242 = vpop.permute.xlu0 %1241
        %1243 = vrot.lane.b32.xlu0 %v1082, 16
        %v1244 = vpop.permute.xlu0 %1243
        %1245 = vrot.lane.b32.xlu0 %v1094, 16
        %v1246 = vpop.permute.xlu0 %1245
        %1247 = vrot.lane.b32.xlu0 %v1106, 16
        %v1248 = vpop.permute.xlu0 %1247
        %1249 = vrot.lane.b32.xlu0 %v1118, 16
        %v1250 = vpop.permute.xlu0 %1249
        %1251 = vrot.lane.b32.xlu0 %v1130, 16
        %v1252 = vpop.permute.xlu0 %1251
        %1253 = vrot.lane.b32.xlu0 %v1142, 16
        %v1254 = vpop.permute.xlu0 %1253
        %1255 = vrot.lane.b32.xlu0 %v1154, 16
        %v1256 = vpop.permute.xlu0 %1255
        %1257 = vrot.lane.b32.xlu0 %v1166, 16
        %v1258 = vpop.permute.xlu0 %1257
        %1259 = vrot.lane.b32.xlu0 %v1178, 16
        %v1260 = vpop.permute.xlu0 %1259
        %1261 = vrot.lane.b32.xlu0 %v1190, 16
        %v1262 = vpop.permute.xlu0 %1261
        %1263 = vrot.lane.b32.xlu0 %v1202, 16
        %v1264 = vpop.permute.xlu0 %1263
        %1265 = vrot.lane.b32.xlu0 %v1214, 16
        %v1266 = vpop.permute.xlu0 %1265
        %1267 = vrot.lane.b32.xlu0 %v1226, 16
        %v1268 = vpop.permute.xlu0 %1267
        %1269 = vrot.lane.b32.xlu0 %v1238, 16
        %v1270 = vpop.permute.xlu0 %1269
        %v1287 = vunpack.c.l.b16 %v324
        %v1288 = vunpack.c.l.b16 %v325
        %v1289 = vunpack.c.l.b16 %v326
        %v1290 = vunpack.c.l.b16 %v327
        %v1291 = vunpack.c.l.b16 %v328
        %v1292 = vunpack.c.l.b16 %v329
        %v1293 = vunpack.c.l.b16 %v330
        %v1294 = vunpack.c.l.b16 %v331
        %v1295 = vunpack.c.l.b16 %v332
        %v1296 = vunpack.c.l.b16 %v333
        %v1297 = vunpack.c.l.b16 %v334
        %v1298 = vunpack.c.l.b16 %v335
        %v1299 = vunpack.c.l.b16 %v336
        %v1300 = vunpack.c.l.b16 %v337
        %v1301 = vunpack.c.l.b16 %v338
        %v1302 = vunpack.c.l.b16 %v339
        %v1303 = vpack.c.b16 %v920, %v1287
        %v1304 = vpack.c.b16 %v922, %v1288
        %v1305 = vpack.c.b16 %v924, %v1289
        %v1306 = vpack.c.b16 %v926, %v1290
        %v1307 = vpack.c.b16 %v928, %v1291
        %v1308 = vpack.c.b16 %v930, %v1292
        %v1309 = vpack.c.b16 %v932, %v1293
        %v1310 = vpack.c.b16 %v934, %v1294
        %v1311 = vpack.c.b16 %v936, %v1295
        %v1312 = vpack.c.b16 %v938, %v1296
        %v1313 = vpack.c.b16 %v940, %v1297
        %v1314 = vpack.c.b16 %v942, %v1298
        %v1315 = vpack.c.b16 %v944, %v1299
        %v1316 = vpack.c.b16 %v946, %v1300
        %v1317 = vpack.c.b16 %v948, %v1301
        %v1318 = vpack.c.b16 %v950, %v1302
        %v1319 = vrot.slane %v1303, 1
        %v1320 = vrot.slane %v1031, 1
        %v1321 = vsel %vm806, %v1319, %v1320
        %v1322 = vrot.slane %v1304, 1
        %v1323 = vrot.slane %v1032, 1
        %v1324 = vsel %vm806, %v1322, %v1323
        %v1325 = vrot.slane %v1305, 1
        %v1326 = vrot.slane %v1033, 1
        %v1327 = vsel %vm806, %v1325, %v1326
        %v1328 = vrot.slane %v1306, 1
        %v1329 = vrot.slane %v1034, 1
        %v1330 = vsel %vm806, %v1328, %v1329
        %v1331 = vrot.slane %v1307, 1
        %v1332 = vrot.slane %v1035, 1
        %v1333 = vsel %vm806, %v1331, %v1332
        %v1334 = vrot.slane %v1308, 1
        %v1335 = vrot.slane %v1036, 1
        %v1336 = vsel %vm806, %v1334, %v1335
        %v1337 = vrot.slane %v1309, 1
        %v1338 = vrot.slane %v1037, 1
        %v1339 = vsel %vm806, %v1337, %v1338
        %v1340 = vrot.slane %v1310, 1
        %v1341 = vrot.slane %v1038, 1
        %v1342 = vsel %vm806, %v1340, %v1341
        %v1343 = vrot.slane %v1311, 1
        %v1344 = vrot.slane %v1039, 1
        %v1345 = vsel %vm806, %v1343, %v1344
        %v1346 = vrot.slane %v1312, 1
        %v1347 = vrot.slane %v1040, 1
        %v1348 = vsel %vm806, %v1346, %v1347
        %v1349 = vrot.slane %v1313, 1
        %v1350 = vrot.slane %v1041, 1
        %v1351 = vsel %vm806, %v1349, %v1350
        %v1352 = vrot.slane %v1314, 1
        %v1353 = vrot.slane %v1042, 1
        %v1354 = vsel %vm806, %v1352, %v1353
        %v1355 = vrot.slane %v1315, 1
        %v1356 = vrot.slane %v1043, 1
        %v1357 = vsel %vm806, %v1355, %v1356
        %v1358 = vrot.slane %v1316, 1
        %v1359 = vrot.slane %v1044, 1
        %v1360 = vsel %vm806, %v1358, %v1359
        %v1361 = vrot.slane %v1317, 1
        %v1362 = vrot.slane %v1045, 1
        %v1363 = vsel %vm806, %v1361, %v1362
        %v1364 = vrot.slane %v1318, 1
        %v1365 = vrot.slane %v1046, 1
        %v1366 = vsel %vm806, %v1364, %v1365
        %1367 = vrot.lane.b32.xlu0 %v1321, 20
        %v1368 = vpop.permute.xlu0 %1367
        %1369 = vrot.lane.b32.xlu0 %v1324, 20
        %v1370 = vpop.permute.xlu0 %1369
        %1371 = vrot.lane.b32.xlu0 %v1327, 20
        %v1372 = vpop.permute.xlu0 %1371
        %1373 = vrot.lane.b32.xlu0 %v1330, 20
        %v1374 = vpop.permute.xlu0 %1373
        %1375 = vrot.lane.b32.xlu0 %v1333, 20
        %v1376 = vpop.permute.xlu0 %1375
        %1377 = vrot.lane.b32.xlu0 %v1336, 20
        %v1378 = vpop.permute.xlu0 %1377
        %1379 = vrot.lane.b32.xlu0 %v1339, 20
        %v1380 = vpop.permute.xlu0 %1379
        %1381 = vrot.lane.b32.xlu0 %v1342, 20
        %v1382 = vpop.permute.xlu0 %1381
        %1383 = vrot.lane.b32.xlu0 %v1345, 20
        %v1384 = vpop.permute.xlu0 %1383
        %1385 = vrot.lane.b32.xlu0 %v1348, 20
        %v1386 = vpop.permute.xlu0 %1385
        %1387 = vrot.lane.b32.xlu0 %v1351, 20
        %v1388 = vpop.permute.xlu0 %1387
        %1389 = vrot.lane.b32.xlu0 %v1354, 20
        %v1390 = vpop.permute.xlu0 %1389
        %1391 = vrot.lane.b32.xlu0 %v1357, 20
        %v1392 = vpop.permute.xlu0 %1391
        %1393 = vrot.lane.b32.xlu0 %v1360, 20
        %v1394 = vpop.permute.xlu0 %1393
        %1395 = vrot.lane.b32.xlu0 %v1363, 20
        %v1396 = vpop.permute.xlu0 %1395
        %1397 = vrot.lane.b32.xlu0 %v1366, 20
        %v1398 = vpop.permute.xlu0 %1397
        %v1431 = vunpack.c.l.b16 %v341
        %v1432 = vunpack.c.l.b16 %v342
        %v1433 = vunpack.c.l.b16 %v343
        %v1434 = vunpack.c.l.b16 %v344
        %v1435 = vunpack.c.l.b16 %v345
        %v1436 = vunpack.c.l.b16 %v346
        %v1437 = vunpack.c.l.b16 %v347
        %v1438 = vunpack.c.l.b16 %v348
        %v1439 = vunpack.c.l.b16 %v349
        %v1440 = vunpack.c.l.b16 %v350
        %v1441 = vunpack.c.l.b16 %v351
        %v1442 = vunpack.c.l.b16 %v352
        %v1443 = vunpack.c.l.b16 %v353
        %v1444 = vunpack.c.l.b16 %v354
        %v1445 = vunpack.c.l.b16 %v355
        %v1446 = vunpack.c.l.b16 %v356
        %v1447 = vunpack.c.l.b16 %v357
        %v1448 = vunpack.c.l.b16 %v358
        %v1449 = vunpack.c.l.b16 %v359
        %v1450 = vunpack.c.l.b16 %v360
        %v1451 = vunpack.c.l.b16 %v361
        %v1452 = vunpack.c.l.b16 %v362
        %v1453 = vunpack.c.l.b16 %v363
        %v1454 = vunpack.c.l.b16 %v364
        %v1455 = vunpack.c.l.b16 %v365
        %v1456 = vunpack.c.l.b16 %v366
        %v1457 = vunpack.c.l.b16 %v367
        %v1458 = vunpack.c.l.b16 %v368
        %v1459 = vunpack.c.l.b16 %v369
        %v1460 = vunpack.c.l.b16 %v370
        %v1461 = vunpack.c.l.b16 %v371
        %v1462 = vunpack.c.l.b16 %v372
        %v1463 = vpack.c.b16 %v1432, %v1431
        %v1464 = vpack.c.b16 %v1434, %v1433
        %v1465 = vpack.c.b16 %v1436, %v1435
        %v1466 = vpack.c.b16 %v1438, %v1437
        %v1467 = vpack.c.b16 %v1440, %v1439
        %v1468 = vpack.c.b16 %v1442, %v1441
        %v1469 = vpack.c.b16 %v1444, %v1443
        %v1470 = vpack.c.b16 %v1446, %v1445
        %v1471 = vpack.c.b16 %v1448, %v1447
        %v1472 = vpack.c.b16 %v1450, %v1449
        %v1473 = vpack.c.b16 %v1452, %v1451
        %v1474 = vpack.c.b16 %v1454, %v1453
        %v1475 = vpack.c.b16 %v1456, %v1455
        %v1476 = vpack.c.b16 %v1458, %v1457
        %v1477 = vpack.c.b16 %v1460, %v1459
        %v1478 = vpack.c.b16 %v1462, %v1461
        %1479 = vrot.lane.b32.xlu0 %v1463, 24
        %v1480 = vpop.permute.xlu0 %1479
        %1481 = vrot.lane.b32.xlu0 %v1464, 24
        %v1482 = vpop.permute.xlu0 %1481
        %1483 = vrot.lane.b32.xlu0 %v1465, 24
        %v1484 = vpop.permute.xlu0 %1483
        %1485 = vrot.lane.b32.xlu0 %v1466, 24
        %v1486 = vpop.permute.xlu0 %1485
        %1487 = vrot.lane.b32.xlu0 %v1467, 24
        %v1488 = vpop.permute.xlu0 %1487
        %1489 = vrot.lane.b32.xlu0 %v1468, 24
        %v1490 = vpop.permute.xlu0 %1489
        %1491 = vrot.lane.b32.xlu0 %v1469, 24
        %v1492 = vpop.permute.xlu0 %1491
        %1493 = vrot.lane.b32.xlu0 %v1470, 24
        %v1494 = vpop.permute.xlu0 %1493
        %1495 = vrot.lane.b32.xlu0 %v1471, 24
        %v1496 = vpop.permute.xlu0 %1495
        %1497 = vrot.lane.b32.xlu0 %v1472, 24
        %v1498 = vpop.permute.xlu0 %1497
        %1499 = vrot.lane.b32.xlu0 %v1473, 24
        %v1500 = vpop.permute.xlu0 %1499
        %1501 = vrot.lane.b32.xlu0 %v1474, 24
        %v1502 = vpop.permute.xlu0 %1501
        %1503 = vrot.lane.b32.xlu0 %v1475, 24
        %v1504 = vpop.permute.xlu0 %1503
        %1505 = vrot.lane.b32.xlu0 %v1476, 24
        %v1506 = vpop.permute.xlu0 %1505
        %1507 = vrot.lane.b32.xlu0 %v1477, 24
        %v1508 = vpop.permute.xlu0 %1507
        %1509 = vrot.lane.b32.xlu0 %v1478, 24
        %v1510 = vpop.permute.xlu0 %1509
        %v1527 = vunpack.c.l.b16 %v373
        %v1528 = vunpack.c.l.b16 %v374
        %v1529 = vunpack.c.l.b16 %v375
        %v1530 = vunpack.c.l.b16 %v376
        %v1531 = vunpack.c.l.b16 %v377
        %v1532 = vunpack.c.l.b16 %v378
        %v1533 = vunpack.c.l.b16 %v379
        %v1534 = vunpack.c.l.b16 %v380
        %v1535 = vunpack.c.l.b16 %v381
        %v1536 = vunpack.c.l.b16 %v382
        %v1537 = vunpack.c.l.b16 %v383
        %v1538 = vunpack.c.l.b16 %v384
        %v1539 = vunpack.c.l.b16 %v385
        %v1540 = vunpack.c.l.b16 %v386
        %v1541 = vunpack.c.l.b16 %v387
        %v1542 = vunpack.c.l.b16 %v388
        %v1543 = vpack.c.b16 %v1527, %v1527
        %v1544 = vpack.c.b16 %v1528, %v1528
        %v1545 = vpack.c.b16 %v1529, %v1529
        %v1546 = vpack.c.b16 %v1530, %v1530
        %v1547 = vpack.c.b16 %v1531, %v1531
        %v1548 = vpack.c.b16 %v1532, %v1532
        %v1549 = vpack.c.b16 %v1533, %v1533
        %v1550 = vpack.c.b16 %v1534, %v1534
        %v1551 = vpack.c.b16 %v1535, %v1535
        %v1552 = vpack.c.b16 %v1536, %v1536
        %v1553 = vpack.c.b16 %v1537, %v1537
        %v1554 = vpack.c.b16 %v1538, %v1538
        %v1555 = vpack.c.b16 %v1539, %v1539
        %v1556 = vpack.c.b16 %v1540, %v1540
        %v1557 = vpack.c.b16 %v1541, %v1541
        %v1558 = vpack.c.b16 %v1542, %v1542
        %v1560 = vshrl.u32 %v1463, 16
        %v1562 = vshll.u32 %v1463, 16
        %v1564 = vrot.slane %v1562, 1
        %v1565 = vor.u32 %v1560, %v1564
        %v1567 = vshll.u32 %v1543, 16
        %v1569 = vrot.slane %v1567, 1
        %v1570 = vsel %vm533, %v1565, %v1569
        %v1572 = vshrl.u32 %v1464, 16
        %v1574 = vshll.u32 %v1464, 16
        %v1576 = vrot.slane %v1574, 1
        %v1577 = vor.u32 %v1572, %v1576
        %v1579 = vshll.u32 %v1544, 16
        %v1581 = vrot.slane %v1579, 1
        %v1582 = vsel %vm533, %v1577, %v1581
        %v1584 = vshrl.u32 %v1465, 16
        %v1586 = vshll.u32 %v1465, 16
        %v1588 = vrot.slane %v1586, 1
        %v1589 = vor.u32 %v1584, %v1588
        %v1591 = vshll.u32 %v1545, 16
        %v1593 = vrot.slane %v1591, 1
        %v1594 = vsel %vm533, %v1589, %v1593
        %v1596 = vshrl.u32 %v1466, 16
        %v1598 = vshll.u32 %v1466, 16
        %v1600 = vrot.slane %v1598, 1
        %v1601 = vor.u32 %v1596, %v1600
        %v1603 = vshll.u32 %v1546, 16
        %v1605 = vrot.slane %v1603, 1
        %v1606 = vsel %vm533, %v1601, %v1605
        %v1608 = vshrl.u32 %v1467, 16
        %v1610 = vshll.u32 %v1467, 16
        %v1612 = vrot.slane %v1610, 1
        %v1613 = vor.u32 %v1608, %v1612
        %v1615 = vshll.u32 %v1547, 16
        %v1617 = vrot.slane %v1615, 1
        %v1618 = vsel %vm533, %v1613, %v1617
        %v1620 = vshrl.u32 %v1468, 16
        %v1622 = vshll.u32 %v1468, 16
        %v1624 = vrot.slane %v1622, 1
        %v1625 = vor.u32 %v1620, %v1624
        %v1627 = vshll.u32 %v1548, 16
        %v1629 = vrot.slane %v1627, 1
        %v1630 = vsel %vm533, %v1625, %v1629
        %v1632 = vshrl.u32 %v1469, 16
        %v1634 = vshll.u32 %v1469, 16
        %v1636 = vrot.slane %v1634, 1
        %v1637 = vor.u32 %v1632, %v1636
        %v1639 = vshll.u32 %v1549, 16
        %v1641 = vrot.slane %v1639, 1
        %v1642 = vsel %vm533, %v1637, %v1641
        %v1644 = vshrl.u32 %v1470, 16
        %v1646 = vshll.u32 %v1470, 16
        %v1648 = vrot.slane %v1646, 1
        %v1649 = vor.u32 %v1644, %v1648
        %v1651 = vshll.u32 %v1550, 16
        %v1653 = vrot.slane %v1651, 1
        %v1654 = vsel %vm533, %v1649, %v1653
        %v1656 = vshrl.u32 %v1471, 16
        %v1658 = vshll.u32 %v1471, 16
        %v1660 = vrot.slane %v1658, 1
        %v1661 = vor.u32 %v1656, %v1660
        %v1663 = vshll.u32 %v1551, 16
        %v1665 = vrot.slane %v1663, 1
        %v1666 = vsel %vm533, %v1661, %v1665
        %v1668 = vshrl.u32 %v1472, 16
        %v1670 = vshll.u32 %v1472, 16
        %v1672 = vrot.slane %v1670, 1
        %v1673 = vor.u32 %v1668, %v1672
        %v1675 = vshll.u32 %v1552, 16
        %v1677 = vrot.slane %v1675, 1
        %v1678 = vsel %vm533, %v1673, %v1677
        %v1680 = vshrl.u32 %v1473, 16
        %v1682 = vshll.u32 %v1473, 16
        %v1684 = vrot.slane %v1682, 1
        %v1685 = vor.u32 %v1680, %v1684
        %v1687 = vshll.u32 %v1553, 16
        %v1689 = vrot.slane %v1687, 1
        %v1690 = vsel %vm533, %v1685, %v1689
        %v1692 = vshrl.u32 %v1474, 16
        %v1694 = vshll.u32 %v1474, 16
        %v1696 = vrot.slane %v1694, 1
        %v1697 = vor.u32 %v1692, %v1696
        %v1699 = vshll.u32 %v1554, 16
        %v1701 = vrot.slane %v1699, 1
        %v1702 = vsel %vm533, %v1697, %v1701
        %v1704 = vshrl.u32 %v1475, 16
        %v1706 = vshll.u32 %v1475, 16
        %v1708 = vrot.slane %v1706, 1
        %v1709 = vor.u32 %v1704, %v1708
        %v1711 = vshll.u32 %v1555, 16
        %v1713 = vrot.slane %v1711, 1
        %v1714 = vsel %vm533, %v1709, %v1713
        %v1716 = vshrl.u32 %v1476, 16
        %v1718 = vshll.u32 %v1476, 16
        %v1720 = vrot.slane %v1718, 1
        %v1721 = vor.u32 %v1716, %v1720
        %v1723 = vshll.u32 %v1556, 16
        %v1725 = vrot.slane %v1723, 1
        %v1726 = vsel %vm533, %v1721, %v1725
        %v1728 = vshrl.u32 %v1477, 16
        %v1730 = vshll.u32 %v1477, 16
        %v1732 = vrot.slane %v1730, 1
        %v1733 = vor.u32 %v1728, %v1732
        %v1735 = vshll.u32 %v1557, 16
        %v1737 = vrot.slane %v1735, 1
        %v1738 = vsel %vm533, %v1733, %v1737
        %v1740 = vshrl.u32 %v1478, 16
        %v1742 = vshll.u32 %v1478, 16
        %v1744 = vrot.slane %v1742, 1
        %v1745 = vor.u32 %v1740, %v1744
        %v1747 = vshll.u32 %v1558, 16
        %v1749 = vrot.slane %v1747, 1
        %v1750 = vsel %vm533, %v1745, %v1749
        %1751 = vrot.lane.b32.xlu0 %v1570, 28
        %v1752 = vpop.permute.xlu0 %1751
        %1753 = vrot.lane.b32.xlu0 %v1582, 28
        %v1754 = vpop.permute.xlu0 %1753
        %1755 = vrot.lane.b32.xlu0 %v1594, 28
        %v1756 = vpop.permute.xlu0 %1755
        %1757 = vrot.lane.b32.xlu0 %v1606, 28
        %v1758 = vpop.permute.xlu0 %1757
        %1759 = vrot.lane.b32.xlu0 %v1618, 28
        %v1760 = vpop.permute.xlu0 %1759
        %1761 = vrot.lane.b32.xlu0 %v1630, 28
        %v1762 = vpop.permute.xlu0 %1761
        %1763 = vrot.lane.b32.xlu0 %v1642, 28
        %v1764 = vpop.permute.xlu0 %1763
        %1765 = vrot.lane.b32.xlu0 %v1654, 28
        %v1766 = vpop.permute.xlu0 %1765
        %1767 = vrot.lane.b32.xlu0 %v1666, 28
        %v1768 = vpop.permute.xlu0 %1767
        %1769 = vrot.lane.b32.xlu0 %v1678, 28
        %v1770 = vpop.permute.xlu0 %1769
        %1771 = vrot.lane.b32.xlu0 %v1690, 28
        %v1772 = vpop.permute.xlu0 %1771
        %1773 = vrot.lane.b32.xlu0 %v1702, 28
        %v1774 = vpop.permute.xlu0 %1773
        %1775 = vrot.lane.b32.xlu0 %v1714, 28
        %v1776 = vpop.permute.xlu0 %1775
        %1777 = vrot.lane.b32.xlu0 %v1726, 28
        %v1778 = vpop.permute.xlu0 %1777
        %1779 = vrot.lane.b32.xlu0 %v1738, 28
        %v1780 = vpop.permute.xlu0 %1779
        %1781 = vrot.lane.b32.xlu0 %v1750, 28
        %v1782 = vpop.permute.xlu0 %1781
        %v1799 = vunpack.c.l.b16 %v389
        %v1800 = vunpack.c.l.b16 %v390
        %v1801 = vunpack.c.l.b16 %v391
        %v1802 = vunpack.c.l.b16 %v392
        %v1803 = vunpack.c.l.b16 %v393
        %v1804 = vunpack.c.l.b16 %v394
        %v1805 = vunpack.c.l.b16 %v395
        %v1806 = vunpack.c.l.b16 %v396
        %v1807 = vunpack.c.l.b16 %v397
        %v1808 = vunpack.c.l.b16 %v398
        %v1809 = vunpack.c.l.b16 %v399
        %v1810 = vunpack.c.l.b16 %v400
        %v1811 = vunpack.c.l.b16 %v401
        %v1812 = vunpack.c.l.b16 %v402
        %v1813 = vunpack.c.l.b16 %v403
        %v1814 = vunpack.c.l.b16 %v404
        %v1815 = vpack.c.b16 %v1432, %v1799
        %v1816 = vpack.c.b16 %v1434, %v1800
        %v1817 = vpack.c.b16 %v1436, %v1801
        %v1818 = vpack.c.b16 %v1438, %v1802
        %v1819 = vpack.c.b16 %v1440, %v1803
        %v1820 = vpack.c.b16 %v1442, %v1804
        %v1821 = vpack.c.b16 %v1444, %v1805
        %v1822 = vpack.c.b16 %v1446, %v1806
        %v1823 = vpack.c.b16 %v1448, %v1807
        %v1824 = vpack.c.b16 %v1450, %v1808
        %v1825 = vpack.c.b16 %v1452, %v1809
        %v1826 = vpack.c.b16 %v1454, %v1810
        %v1827 = vpack.c.b16 %v1456, %v1811
        %v1828 = vpack.c.b16 %v1458, %v1812
        %v1829 = vpack.c.b16 %v1460, %v1813
        %v1830 = vpack.c.b16 %v1462, %v1814
        %v1831 = vrot.slane %v1815, 1
        %v1832 = vrot.slane %v1543, 1
        %v1833 = vsel %vm806, %v1831, %v1832
        %v1834 = vrot.slane %v1816, 1
        %v1835 = vrot.slane %v1544, 1
        %v1836 = vsel %vm806, %v1834, %v1835
        %v1837 = vrot.slane %v1817, 1
        %v1838 = vrot.slane %v1545, 1
        %v1839 = vsel %vm806, %v1837, %v1838
        %v1840 = vrot.slane %v1818, 1
        %v1841 = vrot.slane %v1546, 1
        %v1842 = vsel %vm806, %v1840, %v1841
        %v1843 = vrot.slane %v1819, 1
        %v1844 = vrot.slane %v1547, 1
        %v1845 = vsel %vm806, %v1843, %v1844
        %v1846 = vrot.slane %v1820, 1
        %v1847 = vrot.slane %v1548, 1
        %v1848 = vsel %vm806, %v1846, %v1847
        %v1849 = vrot.slane %v1821, 1
        %v1850 = vrot.slane %v1549, 1
        %v1851 = vsel %vm806, %v1849, %v1850
        %v1852 = vrot.slane %v1822, 1
        %v1853 = vrot.slane %v1550, 1
        %v1854 = vsel %vm806, %v1852, %v1853
        %v1855 = vrot.slane %v1823, 1
        %v1856 = vrot.slane %v1551, 1
        %v1857 = vsel %vm806, %v1855, %v1856
        %v1858 = vrot.slane %v1824, 1
        %v1859 = vrot.slane %v1552, 1
        %v1860 = vsel %vm806, %v1858, %v1859
        %v1861 = vrot.slane %v1825, 1
        %v1862 = vrot.slane %v1553, 1
        %v1863 = vsel %vm806, %v1861, %v1862
        %v1864 = vrot.slane %v1826, 1
        %v1865 = vrot.slane %v1554, 1
        %v1866 = vsel %vm806, %v1864, %v1865
        %v1867 = vrot.slane %v1827, 1
        %v1868 = vrot.slane %v1555, 1
        %v1869 = vsel %vm806, %v1867, %v1868
        %v1870 = vrot.slane %v1828, 1
        %v1871 = vrot.slane %v1556, 1
        %v1872 = vsel %vm806, %v1870, %v1871
        %v1873 = vrot.slane %v1829, 1
        %v1874 = vrot.slane %v1557, 1
        %v1875 = vsel %vm806, %v1873, %v1874
        %v1876 = vrot.slane %v1830, 1
        %v1877 = vrot.slane %v1558, 1
        %v1878 = vsel %vm806, %v1876, %v1877
        %1879 = vrot.lane.b32.xlu0 %v1833, 32
        %v1880 = vpop.permute.xlu0 %1879
        %1881 = vrot.lane.b32.xlu0 %v1836, 32
        %v1882 = vpop.permute.xlu0 %1881
        %1883 = vrot.lane.b32.xlu0 %v1839, 32
        %v1884 = vpop.permute.xlu0 %1883
        %1885 = vrot.lane.b32.xlu0 %v1842, 32
        %v1886 = vpop.permute.xlu0 %1885
        %1887 = vrot.lane.b32.xlu0 %v1845, 32
        %v1888 = vpop.permute.xlu0 %1887
        %1889 = vrot.lane.b32.xlu0 %v1848, 32
        %v1890 = vpop.permute.xlu0 %1889
        %1891 = vrot.lane.b32.xlu0 %v1851, 32
        %v1892 = vpop.permute.xlu0 %1891
        %1893 = vrot.lane.b32.xlu0 %v1854, 32
        %v1894 = vpop.permute.xlu0 %1893
        %1895 = vrot.lane.b32.xlu0 %v1857, 32
        %v1896 = vpop.permute.xlu0 %1895
        %1897 = vrot.lane.b32.xlu0 %v1860, 32
        %v1898 = vpop.permute.xlu0 %1897
        %1899 = vrot.lane.b32.xlu0 %v1863, 32
        %v1900 = vpop.permute.xlu0 %1899
        %1901 = vrot.lane.b32.xlu0 %v1866, 32
        %v1902 = vpop.permute.xlu0 %1901
        %1903 = vrot.lane.b32.xlu0 %v1869, 32
        %v1904 = vpop.permute.xlu0 %1903
        %1905 = vrot.lane.b32.xlu0 %v1872, 32
        %v1906 = vpop.permute.xlu0 %1905
        %1907 = vrot.lane.b32.xlu0 %v1875, 32
        %v1908 = vpop.permute.xlu0 %1907
        %1909 = vrot.lane.b32.xlu0 %v1878, 32
        %v1910 = vpop.permute.xlu0 %1909
        %vm1911 = vcmask 31744
        %v1913 = vsel %vm1911, %v469, %v727
        %v1915 = vsel %vm1911, %v470, %v729
        %v1917 = vsel %vm1911, %v471, %v731
        %v1919 = vsel %vm1911, %v472, %v733
        %v1921 = vsel %vm1911, %v473, %v735
        %v1923 = vsel %vm1911, %v474, %v737
        %v1925 = vsel %vm1911, %v475, %v739
        %v1927 = vsel %vm1911, %v476, %v741
        %v1929 = vsel %vm1911, %v477, %v743
        %v1931 = vsel %vm1911, %v478, %v745
        %v1933 = vsel %vm1911, %v479, %v747
        %v1935 = vsel %vm1911, %v480, %v749
        %v1937 = vsel %vm1911, %v481, %v751
        %v1939 = vsel %vm1911, %v482, %v753
        %v1941 = vsel %vm1911, %v483, %v755
        %v1943 = vsel %vm1911, %v484, %v757
        %vm1944 = vcmask 64512
        %v1946 = vsel %vm1944, %v1913, %v856
        %v1948 = vsel %vm1944, %v1915, %v858
        %v1950 = vsel %vm1944, %v1917, %v860
        %v1952 = vsel %vm1944, %v1919, %v862
        %v1954 = vsel %vm1944, %v1921, %v864
        %v1956 = vsel %vm1944, %v1923, %v866
        %v1958 = vsel %vm1944, %v1925, %v868
        %v1960 = vsel %vm1944, %v1927, %v870
        %v1962 = vsel %vm1944, %v1929, %v872
        %v1964 = vsel %vm1944, %v1931, %v874
        %v1966 = vsel %vm1944, %v1933, %v876
        %v1968 = vsel %vm1944, %v1935, %v878
        %v1970 = vsel %vm1944, %v1937, %v880
        %v1972 = vsel %vm1944, %v1939, %v882
        %v1974 = vsel %vm1944, %v1941, %v884
        %v1976 = vsel %vm1944, %v1943, %v886
        %vm1977 = vcmask 97280
        %v1979 = vsel %vm1977, %v1946, %v968
        %v1981 = vsel %vm1977, %v1948, %v970
        %v1983 = vsel %vm1977, %v1950, %v972
        %v1985 = vsel %vm1977, %v1952, %v974
        %v1987 = vsel %vm1977, %v1954, %v976
        %v1989 = vsel %vm1977, %v1956, %v978
        %v1991 = vsel %vm1977, %v1958, %v980
        %v1993 = vsel %vm1977, %v1960, %v982
        %v1995 = vsel %vm1977, %v1962, %v984
        %v1997 = vsel %vm1977, %v1964, %v986
        %v1999 = vsel %vm1977, %v1966, %v988
        %v2001 = vsel %vm1977, %v1968, %v990
        %v2003 = vsel %vm1977, %v1970, %v992
        %v2005 = vsel %vm1977, %v1972, %v994
        %v2007 = vsel %vm1977, %v1974, %v996
        %v2009 = vsel %vm1977, %v1976, %v998
        %vm2010 = vcmask 130048
        %v2012 = vsel %vm2010, %v1979, %v1240
        %v2014 = vsel %vm2010, %v1981, %v1242
        %v2016 = vsel %vm2010, %v1983, %v1244
        %v2018 = vsel %vm2010, %v1985, %v1246
        %v2020 = vsel %vm2010, %v1987, %v1248
        %v2022 = vsel %vm2010, %v1989, %v1250
        %v2024 = vsel %vm2010, %v1991, %v1252
        %v2026 = vsel %vm2010, %v1993, %v1254
        %v2028 = vsel %vm2010, %v1995, %v1256
        %v2030 = vsel %vm2010, %v1997, %v1258
        %v2032 = vsel %vm2010, %v1999, %v1260
        %v2034 = vsel %vm2010, %v2001, %v1262
        %v2036 = vsel %vm2010, %v2003, %v1264
        %v2038 = vsel %vm2010, %v2005, %v1266
        %v2040 = vsel %vm2010, %v2007, %v1268
        %v2042 = vsel %vm2010, %v2009, %v1270
        %vm2043 = vcmask 162816
        %v2045 = vsel %vm2043, %v2012, %v1368
        %v2047 = vsel %vm2043, %v2014, %v1370
        %v2049 = vsel %vm2043, %v2016, %v1372
        %v2051 = vsel %vm2043, %v2018, %v1374
        %v2053 = vsel %vm2043, %v2020, %v1376
        %v2055 = vsel %vm2043, %v2022, %v1378
        %v2057 = vsel %vm2043, %v2024, %v1380
        %v2059 = vsel %vm2043, %v2026, %v1382
        %v2061 = vsel %vm2043, %v2028, %v1384
        %v2063 = vsel %vm2043, %v2030, %v1386
        %v2065 = vsel %vm2043, %v2032, %v1388
        %v2067 = vsel %vm2043, %v2034, %v1390
        %v2069 = vsel %vm2043, %v2036, %v1392
        %v2071 = vsel %vm2043, %v2038, %v1394
        %v2073 = vsel %vm2043, %v2040, %v1396
        %v2075 = vsel %vm2043, %v2042, %v1398
        %vm2076 = vcmask 195584
        %v2078 = vsel %vm2076, %v2045, %v1480
        %v2080 = vsel %vm2076, %v2047, %v1482
        %v2082 = vsel %vm2076, %v2049, %v1484
        %v2084 = vsel %vm2076, %v2051, %v1486
        %v2086 = vsel %vm2076, %v2053, %v1488
        %v2088 = vsel %vm2076, %v2055, %v1490
        %v2090 = vsel %vm2076, %v2057, %v1492
        %v2092 = vsel %vm2076, %v2059, %v1494
        %v2094 = vsel %vm2076, %v2061, %v1496
        %v2096 = vsel %vm2076, %v2063, %v1498
        %v2098 = vsel %vm2076, %v2065, %v1500
        %v2100 = vsel %vm2076, %v2067, %v1502
        %v2102 = vsel %vm2076, %v2069, %v1504
        %v2104 = vsel %vm2076, %v2071, %v1506
        %v2106 = vsel %vm2076, %v2073, %v1508
        %v2108 = vsel %vm2076, %v2075, %v1510
        %vm2109 = vcmask 228352
        %v2111 = vsel %vm2109, %v2078, %v1752
        %v2113 = vsel %vm2109, %v2080, %v1754
        %v2115 = vsel %vm2109, %v2082, %v1756
        %v2117 = vsel %vm2109, %v2084, %v1758
        %v2119 = vsel %vm2109, %v2086, %v1760
        %v2121 = vsel %vm2109, %v2088, %v1762
        %v2123 = vsel %vm2109, %v2090, %v1764
        %v2125 = vsel %vm2109, %v2092, %v1766
        %v2127 = vsel %vm2109, %v2094, %v1768
        %v2129 = vsel %vm2109, %v2096, %v1770
        %v2131 = vsel %vm2109, %v2098, %v1772
        %v2133 = vsel %vm2109, %v2100, %v1774
        %v2135 = vsel %vm2109, %v2102, %v1776
        %v2137 = vsel %vm2109, %v2104, %v1778
        %v2139 = vsel %vm2109, %v2106, %v1780
        %v2141 = vsel %vm2109, %v2108, %v1782
        %vm2142 = vcmask 261120
        %v2144 = vsel %vm2142, %v2111, %v1880
        %v2146 = vsel %vm2142, %v2113, %v1882
        %v2148 = vsel %vm2142, %v2115, %v1884
        %v2150 = vsel %vm2142, %v2117, %v1886
        %v2152 = vsel %vm2142, %v2119, %v1888
        %v2154 = vsel %vm2142, %v2121, %v1890
        %v2156 = vsel %vm2142, %v2123, %v1892
        %v2158 = vsel %vm2142, %v2125, %v1894
        %v2160 = vsel %vm2142, %v2127, %v1896
        %v2162 = vsel %vm2142, %v2129, %v1898
        %v2164 = vsel %vm2142, %v2131, %v1900
        %v2166 = vsel %vm2142, %v2133, %v1902
        %v2168 = vsel %vm2142, %v2135, %v1904
        %v2170 = vsel %vm2142, %v2137, %v1906
        %v2172 = vsel %vm2142, %v2139, %v1908
        %v2174 = vsel %vm2142, %v2141, %v1910
        %v2175 = vld [vmem:[%s1] sm:$0xf]
        %vm2176 = vcmask 293888
        %v2178 = vsel %vm2176, %v2175, 0
        %v2180 = vsel %vm2176, %v2144, 0
        %v2182 = vsel %vm2176, %v2146, 0
        %v2184 = vsel %vm2176, %v2148, 0
        %v2186 = vsel %vm2176, %v2150, 0
        %v2188 = vsel %vm2176, %v2152, 0
        %v2190 = vsel %vm2176, %v2154, 0
        %v2192 = vsel %vm2176, %v2156, 0
        %v2194 = vsel %vm2176, %v2158, 0
        %v2196 = vsel %vm2176, %v2160, 0
        %v2198 = vsel %vm2176, %v2162, 0
        %v2200 = vsel %vm2176, %v2164, 0
        %v2202 = vsel %vm2176, %v2166, 0
        %v2204 = vsel %vm2176, %v2168, 0
        %v2206 = vsel %vm2176, %v2170, 0
        %v2208 = vsel %vm2176, %v2172, 0
        %v2210 = vsel %vm2176, %v2174, 0
        %2212 = vmatprep.subr.bf16.mxu0 0
        %2213 = vmatpush1.bf16.xpose.msra.mxu0 %v2194
        %2214 = vmatprep.subr.bf16.mxu0 0
        %2215 = vmatpush1.bf16.xpose.msra.mxu0 %v2192
        %2216 = vmatprep.subr.bf16.mxu0 0
        %2217 = vmatpush1.bf16.xpose.msra.mxu0 %v2190
        %2218 = vmatprep.subr.bf16.mxu0 0
        %2219 = vmatpush1.bf16.xpose.msra.mxu0 %v2188
        %2220 = vmatprep.subr.bf16.mxu0 0
        %2221 = vmatpush1.bf16.xpose.msra.mxu0 %v2186
        %2222 = vmatprep.subr.bf16.mxu0 0
        %2223 = vmatpush1.bf16.xpose.msra.mxu0 %v2184
        %2224 = vmatprep.subr.bf16.mxu0 0
        %2225 = vmatpush1.bf16.xpose.msra.mxu0 %v2182
        %2226 = vmatprep.subr.bf16.mxu0 0
        %2227 = vmatpush1.bf16.xpose.msra.mxu0 %v2180
        %2228 = vmatprep.subr.bf16.mxu0 0
        %2229 = vmatpush2.bf16.xpose.msra.mxu0 %v2210
        %2230 = vmatprep.subr.bf16.mxu0 0
        %2231 = vmatpush2.bf16.xpose.msra.mxu0 %v2208
        %2232 = vmatprep.subr.bf16.mxu0 0
        %2233 = vmatpush2.bf16.xpose.msra.mxu0 %v2206
        %2234 = vmatprep.subr.bf16.mxu0 0
        %2235 = vmatpush2.bf16.xpose.msra.mxu0 %v2204
        %2236 = vmatprep.subr.bf16.mxu0 0
        %2237 = vmatpush2.bf16.xpose.msra.mxu0 %v2202
        %2238 = vmatprep.subr.bf16.mxu0 0
        %2239 = vmatpush2.bf16.xpose.msra.mxu0 %v2200
        %2240 = vmatprep.subr.bf16.mxu0 0
        %2241 = vmatpush2.bf16.xpose.msra.mxu0 %v2198
        %2242 = vmatprep.subr.bf16.mxu0 0
        %2243 = vmatpush2.bf16.xpose.msra.mxu0 %v2196
        %2244 = vmatprep.mubr.bf16.mxu0 0
        %2245 = vmatmul.mubr.bf16.gmra.mxu0 %v2178
        %v2246 = vpop.f32.mrf.mxu0
        %v2247 = vadd.f32 0.0, %v2246
        %v2248 = vpop.f32.mrf.mxu0
        %v2249 = vadd.f32 0.0, %v2248
        %v2250 = vpop.f32.mrf.mxu0
        %v2251 = vpop.f32.mrf.mxu0
        %2252 = vdwg.mxu0
        %2253 = vst [vmem:[%s185] sm:$0xff] %v2247
        %2254 = vst [vmem:[%s185 + $0x8] sm:$0xff] %v2249
        %v2255 = vadd.f32 %v2247, %v2249
        %2256 = vadd.xlane.f32.xlu0 %v2255
        %v2257 = vpop.xlane.xlu0 %2256
        %v2258 = vmul.f32 %v2247, %v2247
        %v2259 = vmul.f32 %v2249, %v2249
        %v2260 = vadd.f32 %v2258, %v2259
        %2261 = vadd.xlane.f32.xlu0 %v2260
        %v2262 = vpop.xlane.xlu0 %2261
        %vm2263 = vcmask 7168
        %v2264 = vsel %vm2263, %v2257, %v2262
        %vm2265 = vcmask 15360
        %2266 = vst.msk [vmem:[%s209] sm:$0xff] %vm2265, %v2264
        %s2267 = sand.u32 %s89, 1
        %s2268 = scalar_lea.sflag [#allocation3], %s2267
        %s2269 = sand.u32 %s89, 1
        %s2270 = smul.addr %s2269, 16
        %s2271 = scalar_lea.vmem [#allocation2], %s2270
        %p2272 = scmp.lt.s32.totalorder %s22, 1
        %s2273 = scalar_select %p2272, %s22, 1
        %p2274 = scmp.lt.s32.totalorder %s23, 0
        %s2275 = scalar_select %p2274, %s23, 0
        %s2276 = sadd.s32 %s2275, %s2273
        %s2277 = smul.addr %s2276, 8
        %s2278 = scalar_lea.vmem %s3, %s2277
        // Predicated region
        $region29: #{tpu_custom_call.1} parent=27 // pred_check
          %p2279 = pneg %p99
        $region30: #{tpu_custom_call.1} parent=27 // pred_check_branch
          %2281 = sbr.rel (%p2279) target = $region32
        $region31: #{tpu_custom_call.1} parent=27 // pred_region
          %s2282 = smul.u32 2, %s23
          %s2284 = ssub.s32 256, 256
          %2285 = vsyncadd %s2268, %s2284
          %s2286 = smul.addr %s22, 2
          %s2287 = sadd.s32 %s2282, %s2286
          %s2288 = smul.addr %s2287, 128
          %s2289 = scalar_lea.hbm %s2, %s2288
          %s2291 = sshll.u32 %s2271, 4
          %s2292 = int_to_ptr.vmem [resolvable:$true] %s2291
          %2294 = dma.vmem_to_hbm [thread:$0]  %s2292, 256, %s2289, %s2268
        $region32: #{tpu_custom_call.1} parent=27 // pred_fallthru
          _
        // Predicated region
        $region33: #{tpu_custom_call.1} parent=27 // pred_check
          %p2295 = pneg %p127
        $region34: #{tpu_custom_call.1} parent=27 // pred_check_branch
          %2297 = sbr.rel (%p2295) target = $region36
        $region35: #{tpu_custom_call.1} parent=27 // pred_region
          _
        $region36: #{tpu_custom_call.1} parent=27 // pred_fallthru
          _
      $region28: #{tpu_custom_call.1} parent=5 // pred_fallthru
        _
      %p2298 = scmp.le.s32.totalorder 2, %s13
      // Predicated region
      $region37: #{tpu_custom_call.1} parent=5 // pred_check
        %p2299 = pneg %p2298
      $region38: #{tpu_custom_call.1} parent=5 // pred_check_branch
        %2301 = sbr.rel (%p2299) target = $region40
      $region39: #{tpu_custom_call.1} parent=5 // pred_region
        %s2302 = ssub.s32 %s13, 2
        // Predicated region
        $region41: #{tpu_custom_call.1} parent=39 // pred_check
          %p2303 = pneg %p105
        $region42: #{tpu_custom_call.1} parent=39 // pred_check_branch
          %2305 = sbr.rel (%p2303) target = $region44
        $region43: #{tpu_custom_call.1} parent=39 // pred_region
          %s2306 = sand.u32 %s90, 1
          %s2307 = scalar_lea.sflag [#allocation3], %s2306
          %s2308 = sand.u32 %s90, 1
          %s2309 = smul.addr %s2308, 16
          %s2310 = scalar_lea.vmem [#allocation2], %s2309
          %2311 = dma.done %s2307, 256
        $region44: #{tpu_custom_call.1} parent=39 // pred_fallthru
          _
        // Predicated region
        $region45: #{tpu_custom_call.1} parent=39 // pred_check
          %p2312 = pneg %p133
        $region46: #{tpu_custom_call.1} parent=39 // pred_check_branch
          %2314 = sbr.rel (%p2312) target = $region48
        $region47: #{tpu_custom_call.1} parent=39 // pred_region
          %p2315 = scmp.lt.s32.totalorder %s24, 1
          %s2316 = scalar_select %p2315, %s24, 1
          %p2317 = scmp.lt.s32.totalorder %s25, 0
          %s2318 = scalar_select %p2317, %s25, 0
          %s2319 = sadd.s32 %s2318, %s2316
          %s2320 = smul.addr %s2319, 8
          %s2321 = scalar_lea.vmem %s3, %s2320
        $region48: #{tpu_custom_call.1} parent=39 // pred_fallthru
          _
      $region40: #{tpu_custom_call.1} parent=5 // pred_fallthru
        _
    $region6: #{tpu_custom_call.1} parent=1 // loop_footer
      %s17 = sadd.s32 1, %s13
    $region7: #{tpu_custom_call.1} parent=1 // loop_footer_branch
      %12 = sbr.rel target = $region3
    $region8: #{tpu_custom_call.1} parent=1 // loop_exit
      _
    %2322 = vsyncpa [#allocation3], 1
    %s2323 = scalar_lea.sflag [#allocation3], 1
    %2324 = vsyncpa %s2323, 1

</llo_original>
